<compile_context>
chip_gen: v7x
topology: tpu7x:2x2x1
jax: 0.10.0
libtpu: 0.0.40
codegen_flags: <defaults>
</compile_context>

<pallas_src>
import jax
import jax.numpy as jnp
import numpy as np
from jax.experimental import pallas as pl
from jax.experimental.pallas import tpu as pltpu

HIDDEN_SIZE = 20
INPUT_SIZE = 1
NUM_LAYERS = 1   # kernel implements the single-layer case used by the module
OUTPUT_SIZE = 1


def _gru_linear_kernel(x_ref, h0_ref, wih_ref, whh_ref, bi_ref, bh_ref,
                       wl_ref, bl_ref, out_ref, hN_ref, hs_scr):
    """GRU recurrence + deferred Linear head.

    x_ref  : (T, B, 1)     f32  time-major input
    h0_ref : (B, Hp)       f32  lane-padded initial hidden state
    wih_ref: (1, 3*Hp)     f32  input weights as a row (input_size == 1)
    whh_ref: (Hp, 3*Hp)    f32  hidden weights, gate g in cols [g*Hp, g*Hp+H)
    bi_ref : (1, 3*Hp)     f32  [b_ir+b_hr | b_iz+b_hz | b_in]
    bh_ref : (1, 3*Hp)     f32  [0 | 0 | b_hn]  (b_hn must stay inside r * (...))
    wl_ref : (Hp, 1)       f32  Linear weight (transposed, zero-padded)
    bl_ref : (1, 1)        f32  Linear bias
    out_ref: (B*T, 1)      f32  Linear output, batch-major rows (== out.view(-1, H) order)
    hN_ref : (B, Hp)       f32  final hidden state (lane-padded)
    hs_scr : (T, B, Hp)    f32  VMEM scratch holding every h_t for the deferred head
    """
    T, B, _ = x_ref.shape
    Hp = h0_ref.shape[1]

    wih = wih_ref[...]
    whh = whh_ref[...]
    bi = bi_ref[...]
    bh = bh_ref[...]

    def step(t, h_prev):
        x_t = x_ref[t]                                   # (B, 1)
        gi = x_t * wih + bi                              # (B, 3*Hp): VPU broadcast, no MXU
        gh = jnp.dot(h_prev, whh,
                     preferred_element_type=jnp.float32) + bh   # (B, 3*Hp): one MXU op/step

        r = jax.nn.sigmoid(gi[:, 0:Hp] + gh[:, 0:Hp])
        z = jax.nn.sigmoid(gi[:, Hp:2 * Hp] + gh[:, Hp:2 * Hp])
        n = jnp.tanh(gi[:, 2 * Hp:3 * Hp] + r * gh[:, 2 * Hp:3 * Hp])
        h_new = n + z * (h_prev - n)                     # == (1 - z) * n + z * h_prev

        hs_scr[t] = h_new                                # lane-dense (B, Hp) store
        return h_new

    h_final = jax.lax.fori_loop(0, T, step, h0_ref[...], unroll=True)
    hN_ref[...] = h_final

    # Deferred Linear head: one matmul for all T*B rows, written batch-major in one shot.
    hs = hs_scr[...]                                     # (T, B, Hp)
    hs_bt = pltpu.einshape("tbh->bth", hs)               # (B, T, Hp)
    flat = hs_bt.reshape(B * T, Hp)                      # row index = b*T + t
    y = jnp.dot(flat, wl_ref[...],
                preferred_element_type=jnp.float32) + bl_ref[...]
    out_ref[...] = y                                     # (B*T, 1)


def _prep_gru_params(wih, whh, bih, bhh, w_lin, b_lin, Hp):
    """Repack PyTorch-layout GRU/Linear params into the lane-padded kernel layout."""
    H = whh.shape[1]
    wih_row = jnp.zeros((1, 3 * Hp), jnp.float32)
    whh_pad = jnp.zeros((Hp, 3 * Hp), jnp.float32)
    bi_pad = jnp.zeros((1, 3 * Hp), jnp.float32)
    bh_pad = jnp.zeros((1, 3 * Hp), jnp.float32)
    for g in range(3):                                   # PyTorch gate order: r, z, n
        lo = g * Hp
        wih_row = wih_row.at[0, lo:lo + H].set(wih[g * H:(g + 1) * H, 0])
        whh_pad = whh_pad.at[:H, lo:lo + H].set(whh[g * H:(g + 1) * H, :].T)
        if g < 2:    # r, z: input & hidden biases can be fused
            bi_pad = bi_pad.at[0, lo:lo + H].set(
                bih[g * H:(g + 1) * H] + bhh[g * H:(g + 1) * H])
        else:        # n: b_hn is gated by r, keep it on the hidden side
            bi_pad = bi_pad.at[0, lo:lo + H].set(bih[g * H:(g + 1) * H])
            bh_pad = bh_pad.at[0, lo:lo + H].set(bhh[g * H:(g + 1) * H])
    wl_pad = jnp.zeros((Hp, 1), jnp.float32).at[:H, 0].set(w_lin[0, :])
    bl = b_lin.reshape(1, 1).astype(jnp.float32)
    return wih_row, whh_pad, bi_pad, bh_pad, wl_pad, bl


@jax.jit
def rnn_model_forward(X, hidden_prev, wih, whh, bih, bhh, w_lin, b_lin):
    """Mirrors RNNmodel.forward.

    X:           (B, T, 1)  float32, batch_first like the PyTorch module
    hidden_prev: (1, B, H)  float32
    returns (out, hidden_prev1): out (1, B*T, 1), hidden_prev1 (1, B, H)
    """
    B, T, I = X.shape
    H = whh.shape[1]                         # FIX: hidden size = weight_hh_l0.shape[1]
    assert I == 1, "kernel specialises input_size == 1 (module spec)"
    Hp = ((H + 127) // 128) * 128            # one full 128-lane block per gate

    x_tbi = jnp.transpose(X, (1, 0, 2)).astype(jnp.float32)             # (T, B, 1), tiny
    h0 = jnp.zeros((B, Hp), jnp.float32).at[:, :H].set(hidden_prev[0])  # lane-padded h0

    wih_row, whh_pad, bi_pad, bh_pad, wl_pad, bl = _prep_gru_params(
        wih, whh, bih, bhh, w_lin, b_lin, Hp)

    vmem = pl.BlockSpec(memory_space=pltpu.MemorySpace.VMEM)
    out_flat, hN = pl.pallas_call(
        _gru_linear_kernel,
        out_shape=(jax.ShapeDtypeStruct((B * T, 1), jnp.float32),
                   jax.ShapeDtypeStruct((B, Hp), jnp.float32)),
        in_specs=[vmem] * 8,
        out_specs=(vmem, vmem),
        scratch_shapes=[pltpu.VMEM((T, B, Hp), jnp.float32)],
    )(x_tbi, h0, wih_row, whh_pad, bi_pad, bh_pad, wl_pad, bl)

    out = out_flat[None]                     # (1, B*T, 1) — already batch-major
    hidden_prev1 = hN[:, :H][None]           # (1, B, H)
    return out, hidden_prev1


def _reference_forward(X, hidden_prev, wih, whh, bih, bhh, w_lin, b_lin):
    """Pure-JAX reference matching torch.nn.GRU + Linear semantics (matmul-free, exact f32)."""
    B, T, I = X.shape
    H = whh.shape[1]
    h = hidden_prev[0]
    outs = []
    for t in range(T):
        x_t = X[:, t, :]
        gi = (x_t[:, None, :] * wih[None, :, :]).sum(-1) + bih      # (B, 3H)
        gh = (h[:, None, :] * whh[None, :, :]).sum(-1) + bhh        # (B, 3H)
        i_r, i_z, i_n = gi[:, 0:H], gi[:, H:2 * H], gi[:, 2 * H:3 * H]
        h_r, h_z, h_n = gh[:, 0:H], gh[:, H:2 * H], gh[:, 2 * H:3 * H]
        r = jax.nn.sigmoid(i_r + h_r)
        z = jax.nn.sigmoid(i_z + h_z)
        n = jnp.tanh(i_n + r * h_n)
        h = (1.0 - z) * n + z * h
        outs.append(h)
    out_bth = jnp.stack(outs, axis=1)                               # (B, T, H)
    flat = out_bth.reshape(-1, H)
    y = (flat[:, None, :] * w_lin[None, :, :]).sum(-1) + b_lin
    return y[None], h[None]


if __name__ == "__main__":
    B, T = 2, 8
    H, I = HIDDEN_SIZE, INPUT_SIZE

    key = jax.random.PRNGKey(0)
    k_x, k_h, k1, k2, k3, k4, k5, k6 = jax.random.split(key, 8)

    # inputs
    X = jax.random.normal(k_x, (B, T, I), dtype=jnp.float32)
    hidden_prev = 0.01 * jax.random.normal(k_h, (NUM_LAYERS, B, H), dtype=jnp.float32)

    # GRU params: normal(mean=0, std=0.01), matching nn.init.normal_ in __init__
    wih = 0.01 * jax.random.normal(k1, (3 * H, I), dtype=jnp.float32)   # weight_ih_l0
    whh = 0.01 * jax.random.normal(k2, (3 * H, H), dtype=jnp.float32)   # weight_hh_l0
    bih = 0.01 * jax.random.normal(k3, (3 * H,), dtype=jnp.float32)     # bias_ih_l0
    bhh = 0.01 * jax.random.normal(k4, (3 * H,), dtype=jnp.float32)     # bias_hh_l0

    # Linear(H, 1) params: deterministic uniform-ish init (synthetic, not a checkpoint)
    bound = 1.0 / np.sqrt(H)
    w_lin = jax.random.uniform(k5, (OUTPUT_SIZE, H), dtype=jnp.float32,
                               minval=-bound, maxval=bound)
    b_lin = jax.random.uniform(k6, (OUTPUT_SIZE,), dtype=jnp.float32,
                               minval=-bound, maxval=bound)

    out, hidden_prev1 = rnn_model_forward(X, hidden_prev, wih, whh, bih, bhh, w_lin, b_lin)
    jax.block_until_ready((out, hidden_prev1))

    assert out.shape == (1, B * T, 1), out.shape
    assert hidden_prev1.shape == (NUM_LAYERS, B, H), hidden_prev1.shape

    out_ref, h_ref = _reference_forward(X, hidden_prev, wih, whh, bih, bhh, w_lin, b_lin)
    np.testing.assert_allclose(np.asarray(out), np.asarray(out_ref), rtol=1e-3, atol=1e-4)
    np.testing.assert_allclose(np.asarray(hidden_prev1), np.asarray(h_ref), rtol=1e-3, atol=1e-4)

    print("KERNEL_OK")
</pallas_src>

<mosaic_0001>
module attributes {stable_mosaic.version = 11 : i64} {
  func.func @_gru_linear_kernel(%arg0: memref<8x2x1xf32, #tpu.memory_space<vmem>>, %arg1: memref<2x128xf32, #tpu.memory_space<vmem>>, %arg2: memref<1x384xf32, #tpu.memory_space<vmem>>, %arg3: memref<128x384xf32, #tpu.memory_space<vmem>>, %arg4: memref<1x384xf32, #tpu.memory_space<vmem>>, %arg5: memref<1x384xf32, #tpu.memory_space<vmem>>, %arg6: memref<128x1xf32, #tpu.memory_space<vmem>>, %arg7: memref<1x1xf32, #tpu.memory_space<vmem>>, %arg8: memref<16x1xf32, #tpu.memory_space<vmem>>, %arg9: memref<2x128xf32, #tpu.memory_space<vmem>>, %arg10: memref<8x2x128xf32, #tpu.memory_space<vmem>>) attributes {dimension_semantics = [], scalar_prefetch = 0 : i64, scratch_operands = 1 : i64, tpu.core_type = #tpu.core_type<tc>} {
    %c0 = arith.constant 0 : index
    %c0_0 = arith.constant 0 : index
    %0 = vector.load %arg2[%c0, %c0_0] : memref<1x384xf32, #tpu.memory_space<vmem>>, vector<1x384xf32>
    %c0_1 = arith.constant 0 : index
    %c0_2 = arith.constant 0 : index
    %1 = vector.load %arg3[%c0_1, %c0_2] : memref<128x384xf32, #tpu.memory_space<vmem>>, vector<128x384xf32>
    %c0_3 = arith.constant 0 : index
    %c0_4 = arith.constant 0 : index
    %2 = vector.load %arg4[%c0_3, %c0_4] : memref<1x384xf32, #tpu.memory_space<vmem>>, vector<1x384xf32>
    %c0_5 = arith.constant 0 : index
    %c0_6 = arith.constant 0 : index
    %3 = vector.load %arg5[%c0_5, %c0_6] : memref<1x384xf32, #tpu.memory_space<vmem>>, vector<1x384xf32>
    %c0_7 = arith.constant 0 : index
    %c0_8 = arith.constant 0 : index
    %4 = vector.load %arg1[%c0_7, %c0_8] : memref<2x128xf32, #tpu.memory_space<vmem>>, vector<2x128xf32>
    %c0_i32 = arith.constant 0 : i32
    %5 = arith.index_cast %c0_i32 : i32 to index
    %c0_9 = arith.constant 0 : index
    %c0_10 = arith.constant 0 : index
    %6 = vector.load %arg0[%5, %c0_9, %c0_10] : memref<8x2x1xf32, #tpu.memory_space<vmem>>, vector<1x2x1xf32>
    %7 = vector.shape_cast %6 : vector<1x2x1xf32> to vector<2x1xf32>
    %8 = vector.broadcast %7 : vector<2x1xf32> to vector<2x384xf32>
    %9 = vector.broadcast %0 : vector<1x384xf32> to vector<2x384xf32>
    %10 = arith.mulf %8, %9 : vector<2x384xf32>
    %11 = vector.broadcast %2 : vector<1x384xf32> to vector<2x384xf32>
    %12 = arith.addf %10, %11 : vector<2x384xf32>
    %cst = arith.constant dense<0.000000e+00> : vector<2x384xf32>
    %13 = tpu.matmul %4, %1, %cst {dimension_numbers = #tpu.dot_dimension_numbers<[1], [0], [0], [1], [0, 0, 1, 1], [], []>} : vector<2x128xf32>, vector<128x384xf32>, vector<2x384xf32> -> vector<2x384xf32>
    %14 = vector.broadcast %3 : vector<1x384xf32> to vector<2x384xf32>
    %15 = arith.addf %13, %14 : vector<2x384xf32>
    %16 = vector.extract_strided_slice %12 {offsets = [0, 0], sizes = [2, 128], strides = [1, 1]} : vector<2x384xf32> to vector<2x128xf32>
    %17 = vector.extract_strided_slice %15 {offsets = [0, 0], sizes = [2, 128], strides = [1, 1]} : vector<2x384xf32> to vector<2x128xf32>
    %18 = arith.addf %16, %17 : vector<2x128xf32>
    %19 = arith.negf %18 : vector<2x128xf32>
    %20 = math.exp %19 : vector<2x128xf32>
    %cst_11 = arith.constant 1.000000e+00 : f32
    %21 = vector.broadcast %cst_11 : f32 to vector<2x128xf32>
    %22 = arith.addf %21, %20 : vector<2x128xf32>
    %23 = arith.divf %21, %22 : vector<2x128xf32>
    %24 = vector.extract_strided_slice %12 {offsets = [0, 128], sizes = [2, 128], strides = [1, 1]} : vector<2x384xf32> to vector<2x128xf32>
    %25 = vector.extract_strided_slice %15 {offsets = [0, 128], sizes = [2, 128], strides = [1, 1]} : vector<2x384xf32> to vector<2x128xf32>
    %26 = arith.addf %24, %25 : vector<2x128xf32>
    %27 = arith.negf %26 : vector<2x128xf32>
    %28 = math.exp %27 : vector<2x128xf32>
    %cst_12 = arith.constant 1.000000e+00 : f32
    %29 = vector.broadcast %cst_12 : f32 to vector<2x128xf32>
    %30 = arith.addf %29, %28 : vector<2x128xf32>
    %31 = arith.divf %29, %30 : vector<2x128xf32>
    %32 = vector.extract_strided_slice %12 {offsets = [0, 256], sizes = [2, 128], strides = [1, 1]} : vector<2x384xf32> to vector<2x128xf32>
    %33 = vector.extract_strided_slice %15 {offsets = [0, 256], sizes = [2, 128], strides = [1, 1]} : vector<2x384xf32> to vector<2x128xf32>
    %34 = arith.mulf %23, %33 : vector<2x128xf32>
    %35 = arith.addf %32, %34 : vector<2x128xf32>
    %36 = math.tanh %35 : vector<2x128xf32>
    %37 = arith.subf %4, %36 : vector<2x128xf32>
    %38 = arith.mulf %31, %37 : vector<2x128xf32>
    %39 = arith.addf %36, %38 : vector<2x128xf32>
    %40 = arith.index_cast %c0_i32 : i32 to index
    %c0_13 = arith.constant 0 : index
    %c0_14 = arith.constant 0 : index
    %41 = vector.load %arg10[%40, %c0_13, %c0_14] : memref<8x2x128xf32, #tpu.memory_space<vmem>>, vector<1x2x128xf32>
    %42 = vector.shape_cast %41 : vector<1x2x128xf32> to vector<2x128xf32>
    %43 = vector.shape_cast %39 : vector<2x128xf32> to vector<1x2x128xf32>
    tpu.vector_store %arg10[%40, %c0_13, %c0_14], %43 {strides = array<i32>} : memref<8x2x128xf32, #tpu.memory_space<vmem>>, vector<1x2x128xf32>,
    %c1_i32 = arith.constant 1 : i32
    %44 = arith.index_cast %c1_i32 : i32 to index
    %c0_15 = arith.constant 0 : index
    %c0_16 = arith.constant 0 : index
    %45 = vector.load %arg0[%44, %c0_15, %c0_16] : memref<8x2x1xf32, #tpu.memory_space<vmem>>, vector<1x2x1xf32>
    %46 = vector.shape_cast %45 : vector<1x2x1xf32> to vector<2x1xf32>
    %47 = vector.broadcast %46 : vector<2x1xf32> to vector<2x384xf32>
    %48 = vector.broadcast %0 : vector<1x384xf32> to vector<2x384xf32>
    %49 = arith.mulf %47, %48 : vector<2x384xf32>
    %50 = vector.broadcast %2 : vector<1x384xf32> to vector<2x384xf32>
    %51 = arith.addf %49, %50 : vector<2x384xf32>
    %cst_17 = arith.constant dense<0.000000e+00> : vector<2x384xf32>
    %52 = tpu.matmul %39, %1, %cst_17 {dimension_numbers = #tpu.dot_dimension_numbers<[1], [0], [0], [1], [0, 0, 1, 1], [], []>} : vector<2x128xf32>, vector<128x384xf32>, vector<2x384xf32> -> vector<2x384xf32>
    %53 = vector.broadcast %3 : vector<1x384xf32> to vector<2x384xf32>
    %54 = arith.addf %52, %53 : vector<2x384xf32>
    %55 = vector.extract_strided_slice %51 {offsets = [0, 0], sizes = [2, 128], strides = [1, 1]} : vector<2x384xf32> to vector<2x128xf32>
    %56 = vector.extract_strided_slice %54 {offsets = [0, 0], sizes = [2, 128], strides = [1, 1]} : vector<2x384xf32> to vector<2x128xf32>
    %57 = arith.addf %55, %56 : vector<2x128xf32>
    %58 = arith.negf %57 : vector<2x128xf32>
    %59 = math.exp %58 : vector<2x128xf32>
    %cst_18 = arith.constant 1.000000e+00 : f32
    %60 = vector.broadcast %cst_18 : f32 to vector<2x128xf32>
    %61 = arith.addf %60, %59 : vector<2x128xf32>
    %62 = arith.divf %60, %61 : vector<2x128xf32>
    %63 = vector.extract_strided_slice %51 {offsets = [0, 128], sizes = [2, 128], strides = [1, 1]} : vector<2x384xf32> to vector<2x128xf32>
    %64 = vector.extract_strided_slice %54 {offsets = [0, 128], sizes = [2, 128], strides = [1, 1]} : vector<2x384xf32> to vector<2x128xf32>
    %65 = arith.addf %63, %64 : vector<2x128xf32>
    %66 = arith.negf %65 : vector<2x128xf32>
    %67 = math.exp %66 : vector<2x128xf32>
    %cst_19 = arith.constant 1.000000e+00 : f32
    %68 = vector.broadcast %cst_19 : f32 to vector<2x128xf32>
    %69 = arith.addf %68, %67 : vector<2x128xf32>
    %70 = arith.divf %68, %69 : vector<2x128xf32>
    %71 = vector.extract_strided_slice %51 {offsets = [0, 256], sizes = [2, 128], strides = [1, 1]} : vector<2x384xf32> to vector<2x128xf32>
    %72 = vector.extract_strided_slice %54 {offsets = [0, 256], sizes = [2, 128], strides = [1, 1]} : vector<2x384xf32> to vector<2x128xf32>
    %73 = arith.mulf %62, %72 : vector<2x128xf32>
    %74 = arith.addf %71, %73 : vector<2x128xf32>
    %75 = math.tanh %74 : vector<2x128xf32>
    %76 = arith.subf %39, %75 : vector<2x128xf32>
    %77 = arith.mulf %70, %76 : vector<2x128xf32>
    %78 = arith.addf %75, %77 : vector<2x128xf32>
    %79 = arith.index_cast %c1_i32 : i32 to index
    %c0_20 = arith.constant 0 : index
    %c0_21 = arith.constant 0 : index
    %80 = vector.load %arg10[%79, %c0_20, %c0_21] : memref<8x2x128xf32, #tpu.memory_space<vmem>>, vector<1x2x128xf32>
    %81 = vector.shape_cast %80 : vector<1x2x128xf32> to vector<2x128xf32>
    %82 = vector.shape_cast %78 : vector<2x128xf32> to vector<1x2x128xf32>
    tpu.vector_store %arg10[%79, %c0_20, %c0_21], %82 {strides = array<i32>} : memref<8x2x128xf32, #tpu.memory_space<vmem>>, vector<1x2x128xf32>,
    %c2_i32 = arith.constant 2 : i32
    %83 = arith.index_cast %c2_i32 : i32 to index
    %c0_22 = arith.constant 0 : index
    %c0_23 = arith.constant 0 : index
    %84 = vector.load %arg0[%83, %c0_22, %c0_23] : memref<8x2x1xf32, #tpu.memory_space<vmem>>, vector<1x2x1xf32>
    %85 = vector.shape_cast %84 : vector<1x2x1xf32> to vector<2x1xf32>
    %86 = vector.broadcast %85 : vector<2x1xf32> to vector<2x384xf32>
    %87 = vector.broadcast %0 : vector<1x384xf32> to vector<2x384xf32>
    %88 = arith.mulf %86, %87 : vector<2x384xf32>
    %89 = vector.broadcast %2 : vector<1x384xf32> to vector<2x384xf32>
    %90 = arith.addf %88, %89 : vector<2x384xf32>
    %cst_24 = arith.constant dense<0.000000e+00> : vector<2x384xf32>
    %91 = tpu.matmul %78, %1, %cst_24 {dimension_numbers = #tpu.dot_dimension_numbers<[1], [0], [0], [1], [0, 0, 1, 1], [], []>} : vector<2x128xf32>, vector<128x384xf32>, vector<2x384xf32> -> vector<2x384xf32>
    %92 = vector.broadcast %3 : vector<1x384xf32> to vector<2x384xf32>
    %93 = arith.addf %91, %92 : vector<2x384xf32>
    %94 = vector.extract_strided_slice %90 {offsets = [0, 0], sizes = [2, 128], strides = [1, 1]} : vector<2x384xf32> to vector<2x128xf32>
    %95 = vector.extract_strided_slice %93 {offsets = [0, 0], sizes = [2, 128], strides = [1, 1]} : vector<2x384xf32> to vector<2x128xf32>
    %96 = arith.addf %94, %95 : vector<2x128xf32>
    %97 = arith.negf %96 : vector<2x128xf32>
    %98 = math.exp %97 : vector<2x128xf32>
    %cst_25 = arith.constant 1.000000e+00 : f32
    %99 = vector.broadcast %cst_25 : f32 to vector<2x128xf32>
    %100 = arith.addf %99, %98 : vector<2x128xf32>
    %101 = arith.divf %99, %100 : vector<2x128xf32>
    %102 = vector.extract_strided_slice %90 {offsets = [0, 128], sizes = [2, 128], strides = [1, 1]} : vector<2x384xf32> to vector<2x128xf32>
    %103 = vector.extract_strided_slice %93 {offsets = [0, 128], sizes = [2, 128], strides = [1, 1]} : vector<2x384xf32> to vector<2x128xf32>
    %104 = arith.addf %102, %103 : vector<2x128xf32>
    %105 = arith.negf %104 : vector<2x128xf32>
    %106 = math.exp %105 : vector<2x128xf32>
    %cst_26 = arith.constant 1.000000e+00 : f32
    %107 = vector.broadcast %cst_26 : f32 to vector<2x128xf32>
    %108 = arith.addf %107, %106 : vector<2x128xf32>
    %109 = arith.divf %107, %108 : vector<2x128xf32>
    %110 = vector.extract_strided_slice %90 {offsets = [0, 256], sizes = [2, 128], strides = [1, 1]} : vector<2x384xf32> to vector<2x128xf32>
    %111 = vector.extract_strided_slice %93 {offsets = [0, 256], sizes = [2, 128], strides = [1, 1]} : vector<2x384xf32> to vector<2x128xf32>
    %112 = arith.mulf %101, %111 : vector<2x128xf32>
    %113 = arith.addf %110, %112 : vector<2x128xf32>
    %114 = math.tanh %113 : vector<2x128xf32>
    %115 = arith.subf %78, %114 : vector<2x128xf32>
    %116 = arith.mulf %109, %115 : vector<2x128xf32>
    %117 = arith.addf %114, %116 : vector<2x128xf32>
    %118 = arith.index_cast %c2_i32 : i32 to index
    %c0_27 = arith.constant 0 : index
    %c0_28 = arith.constant 0 : index
    %119 = vector.load %arg10[%118, %c0_27, %c0_28] : memref<8x2x128xf32, #tpu.memory_space<vmem>>, vector<1x2x128xf32>
    %120 = vector.shape_cast %119 : vector<1x2x128xf32> to vector<2x128xf32>
    %121 = vector.shape_cast %117 : vector<2x128xf32> to vector<1x2x128xf32>
    tpu.vector_store %arg10[%118, %c0_27, %c0_28], %121 {strides = array<i32>} : memref<8x2x128xf32, #tpu.memory_space<vmem>>, vector<1x2x128xf32>,
    %c3_i32 = arith.constant 3 : i32
    %122 = arith.index_cast %c3_i32 : i32 to index
    %c0_29 = arith.constant 0 : index
    %c0_30 = arith.constant 0 : index
    %123 = vector.load %arg0[%122, %c0_29, %c0_30] : memref<8x2x1xf32, #tpu.memory_space<vmem>>, vector<1x2x1xf32>
    %124 = vector.shape_cast %123 : vector<1x2x1xf32> to vector<2x1xf32>
    %125 = vector.broadcast %124 : vector<2x1xf32> to vector<2x384xf32>
    %126 = vector.broadcast %0 : vector<1x384xf32> to vector<2x384xf32>
    %127 = arith.mulf %125, %126 : vector<2x384xf32>
    %128 = vector.broadcast %2 : vector<1x384xf32> to vector<2x384xf32>
    %129 = arith.addf %127, %128 : vector<2x384xf32>
    %cst_31 = arith.constant dense<0.000000e+00> : vector<2x384xf32>
    %130 = tpu.matmul %117, %1, %cst_31 {dimension_numbers = #tpu.dot_dimension_numbers<[1], [0], [0], [1], [0, 0, 1, 1], [], []>} : vector<2x128xf32>, vector<128x384xf32>, vector<2x384xf32> -> vector<2x384xf32>
    %131 = vector.broadcast %3 : vector<1x384xf32> to vector<2x384xf32>
    %132 = arith.addf %130, %131 : vector<2x384xf32>
    %133 = vector.extract_strided_slice %129 {offsets = [0, 0], sizes = [2, 128], strides = [1, 1]} : vector<2x384xf32> to vector<2x128xf32>
    %134 = vector.extract_strided_slice %132 {offsets = [0, 0], sizes = [2, 128], strides = [1, 1]} : vector<2x384xf32> to vector<2x128xf32>
    %135 = arith.addf %133, %134 : vector<2x128xf32>
    %136 = arith.negf %135 : vector<2x128xf32>
    %137 = math.exp %136 : vector<2x128xf32>
    %cst_32 = arith.constant 1.000000e+00 : f32
    %138 = vector.broadcast %cst_32 : f32 to vector<2x128xf32>
    %139 = arith.addf %138, %137 : vector<2x128xf32>
    %140 = arith.divf %138, %139 : vector<2x128xf32>
    %141 = vector.extract_strided_slice %129 {offsets = [0, 128], sizes = [2, 128], strides = [1, 1]} : vector<2x384xf32> to vector<2x128xf32>
    %142 = vector.extract_strided_slice %132 {offsets = [0, 128], sizes = [2, 128], strides = [1, 1]} : vector<2x384xf32> to vector<2x128xf32>
    %143 = arith.addf %141, %142 : vector<2x128xf32>
    %144 = arith.negf %143 : vector<2x128xf32>
    %145 = math.exp %144 : vector<2x128xf32>
    %cst_33 = arith.constant 1.000000e+00 : f32
    %146 = vector.broadcast %cst_33 : f32 to vector<2x128xf32>
    %147 = arith.addf %146, %145 : vector<2x128xf32>
    %148 = arith.divf %146, %147 : vector<2x128xf32>
    %149 = vector.extract_strided_slice %129 {offsets = [0, 256], sizes = [2, 128], strides = [1, 1]} : vector<2x384xf32> to vector<2x128xf32>
    %150 = vector.extract_strided_slice %132 {offsets = [0, 256], sizes = [2, 128], strides = [1, 1]} : vector<2x384xf32> to vector<2x128xf32>
    %151 = arith.mulf %140, %150 : vector<2x128xf32>
    %152 = arith.addf %149, %151 : vector<2x128xf32>
    %153 = math.tanh %152 : vector<2x128xf32>
    %154 = arith.subf %117, %153 : vector<2x128xf32>
    %155 = arith.mulf %148, %154 : vector<2x128xf32>
    %156 = arith.addf %153, %155 : vector<2x128xf32>
    %157 = arith.index_cast %c3_i32 : i32 to index
    %c0_34 = arith.constant 0 : index
    %c0_35 = arith.constant 0 : index
    %158 = vector.load %arg10[%157, %c0_34, %c0_35] : memref<8x2x128xf32, #tpu.memory_space<vmem>>, vector<1x2x128xf32>
    %159 = vector.shape_cast %158 : vector<1x2x128xf32> to vector<2x128xf32>
    %160 = vector.shape_cast %156 : vector<2x128xf32> to vector<1x2x128xf32>
    tpu.vector_store %arg10[%157, %c0_34, %c0_35], %160 {strides = array<i32>} : memref<8x2x128xf32, #tpu.memory_space<vmem>>, vector<1x2x128xf32>,
    %c4_i32 = arith.constant 4 : i32
    %161 = arith.index_cast %c4_i32 : i32 to index
    %c0_36 = arith.constant 0 : index
    %c0_37 = arith.constant 0 : index
    %162 = vector.load %arg0[%161, %c0_36, %c0_37] : memref<8x2x1xf32, #tpu.memory_space<vmem>>, vector<1x2x1xf32>
    %163 = vector.shape_cast %162 : vector<1x2x1xf32> to vector<2x1xf32>
    %164 = vector.broadcast %163 : vector<2x1xf32> to vector<2x384xf32>
    %165 = vector.broadcast %0 : vector<1x384xf32> to vector<2x384xf32>
    %166 = arith.mulf %164, %165 : vector<2x384xf32>
    %167 = vector.broadcast %2 : vector<1x384xf32> to vector<2x384xf32>
    %168 = arith.addf %166, %167 : vector<2x384xf32>
    %cst_38 = arith.constant dense<0.000000e+00> : vector<2x384xf32>
    %169 = tpu.matmul %156, %1, %cst_38 {dimension_numbers = #tpu.dot_dimension_numbers<[1], [0], [0], [1], [0, 0, 1, 1], [], []>} : vector<2x128xf32>, vector<128x384xf32>, vector<2x384xf32> -> vector<2x384xf32>
    %170 = vector.broadcast %3 : vector<1x384xf32> to vector<2x384xf32>
    %171 = arith.addf %169, %170 : vector<2x384xf32>
    %172 = vector.extract_strided_slice %168 {offsets = [0, 0], sizes = [2, 128], strides = [1, 1]} : vector<2x384xf32> to vector<2x128xf32>
    %173 = vector.extract_strided_slice %171 {offsets = [0, 0], sizes = [2, 128], strides = [1, 1]} : vector<2x384xf32> to vector<2x128xf32>
    %174 = arith.addf %172, %173 : vector<2x128xf32>
    %175 = arith.negf %174 : vector<2x128xf32>
    %176 = math.exp %175 : vector<2x128xf32>
    %cst_39 = arith.constant 1.000000e+00 : f32
    %177 = vector.broadcast %cst_39 : f32 to vector<2x128xf32>
    %178 = arith.addf %177, %176 : vector<2x128xf32>
    %179 = arith.divf %177, %178 : vector<2x128xf32>
    %180 = vector.extract_strided_slice %168 {offsets = [0, 128], sizes = [2, 128], strides = [1, 1]} : vector<2x384xf32> to vector<2x128xf32>
    %181 = vector.extract_strided_slice %171 {offsets = [0, 128], sizes = [2, 128], strides = [1, 1]} : vector<2x384xf32> to vector<2x128xf32>
    %182 = arith.addf %180, %181 : vector<2x128xf32>
    %183 = arith.negf %182 : vector<2x128xf32>
    %184 = math.exp %183 : vector<2x128xf32>
    %cst_40 = arith.constant 1.000000e+00 : f32
    %185 = vector.broadcast %cst_40 : f32 to vector<2x128xf32>
    %186 = arith.addf %185, %184 : vector<2x128xf32>
    %187 = arith.divf %185, %186 : vector<2x128xf32>
    %188 = vector.extract_strided_slice %168 {offsets = [0, 256], sizes = [2, 128], strides = [1, 1]} : vector<2x384xf32> to vector<2x128xf32>
    %189 = vector.extract_strided_slice %171 {offsets = [0, 256], sizes = [2, 128], strides = [1, 1]} : vector<2x384xf32> to vector<2x128xf32>
    %190 = arith.mulf %179, %189 : vector<2x128xf32>
    %191 = arith.addf %188, %190 : vector<2x128xf32>
    %192 = math.tanh %191 : vector<2x128xf32>
    %193 = arith.subf %156, %192 : vector<2x128xf32>
    %194 = arith.mulf %187, %193 : vector<2x128xf32>
    %195 = arith.addf %192, %194 : vector<2x128xf32>
    %196 = arith.index_cast %c4_i32 : i32 to index
    %c0_41 = arith.constant 0 : index
    %c0_42 = arith.constant 0 : index
    %197 = vector.load %arg10[%196, %c0_41, %c0_42] : memref<8x2x128xf32, #tpu.memory_space<vmem>>, vector<1x2x128xf32>
    %198 = vector.shape_cast %197 : vector<1x2x128xf32> to vector<2x128xf32>
    %199 = vector.shape_cast %195 : vector<2x128xf32> to vector<1x2x128xf32>
    tpu.vector_store %arg10[%196, %c0_41, %c0_42], %199 {strides = array<i32>} : memref<8x2x128xf32, #tpu.memory_space<vmem>>, vector<1x2x128xf32>,
    %c5_i32 = arith.constant 5 : i32
    %200 = arith.index_cast %c5_i32 : i32 to index
    %c0_43 = arith.constant 0 : index
    %c0_44 = arith.constant 0 : index
    %201 = vector.load %arg0[%200, %c0_43, %c0_44] : memref<8x2x1xf32, #tpu.memory_space<vmem>>, vector<1x2x1xf32>
    %202 = vector.shape_cast %201 : vector<1x2x1xf32> to vector<2x1xf32>
    %203 = vector.broadcast %202 : vector<2x1xf32> to vector<2x384xf32>
    %204 = vector.broadcast %0 : vector<1x384xf32> to vector<2x384xf32>
    %205 = arith.mulf %203, %204 : vector<2x384xf32>
    %206 = vector.broadcast %2 : vector<1x384xf32> to vector<2x384xf32>
    %207 = arith.addf %205, %206 : vector<2x384xf32>
    %cst_45 = arith.constant dense<0.000000e+00> : vector<2x384xf32>
    %208 = tpu.matmul %195, %1, %cst_45 {dimension_numbers = #tpu.dot_dimension_numbers<[1], [0], [0], [1], [0, 0, 1, 1], [], []>} : vector<2x128xf32>, vector<128x384xf32>, vector<2x384xf32> -> vector<2x384xf32>
    %209 = vector.broadcast %3 : vector<1x384xf32> to vector<2x384xf32>
    %210 = arith.addf %208, %209 : vector<2x384xf32>
    %211 = vector.extract_strided_slice %207 {offsets = [0, 0], sizes = [2, 128], strides = [1, 1]} : vector<2x384xf32> to vector<2x128xf32>
    %212 = vector.extract_strided_slice %210 {offsets = [0, 0], sizes = [2, 128], strides = [1, 1]} : vector<2x384xf32> to vector<2x128xf32>
    %213 = arith.addf %211, %212 : vector<2x128xf32>
    %214 = arith.negf %213 : vector<2x128xf32>
    %215 = math.exp %214 : vector<2x128xf32>
    %cst_46 = arith.constant 1.000000e+00 : f32
    %216 = vector.broadcast %cst_46 : f32 to vector<2x128xf32>
    %217 = arith.addf %216, %215 : vector<2x128xf32>
    %218 = arith.divf %216, %217 : vector<2x128xf32>
    %219 = vector.extract_strided_slice %207 {offsets = [0, 128], sizes = [2, 128], strides = [1, 1]} : vector<2x384xf32> to vector<2x128xf32>
    %220 = vector.extract_strided_slice %210 {offsets = [0, 128], sizes = [2, 128], strides = [1, 1]} : vector<2x384xf32> to vector<2x128xf32>
    %221 = arith.addf %219, %220 : vector<2x128xf32>
    %222 = arith.negf %221 : vector<2x128xf32>
    %223 = math.exp %222 : vector<2x128xf32>
    %cst_47 = arith.constant 1.000000e+00 : f32
    %224 = vector.broadcast %cst_47 : f32 to vector<2x128xf32>
    %225 = arith.addf %224, %223 : vector<2x128xf32>
    %226 = arith.divf %224, %225 : vector<2x128xf32>
    %227 = vector.extract_strided_slice %207 {offsets = [0, 256], sizes = [2, 128], strides = [1, 1]} : vector<2x384xf32> to vector<2x128xf32>
    %228 = vector.extract_strided_slice %210 {offsets = [0, 256], sizes = [2, 128], strides = [1, 1]} : vector<2x384xf32> to vector<2x128xf32>
    %229 = arith.mulf %218, %228 : vector<2x128xf32>
    %230 = arith.addf %227, %229 : vector<2x128xf32>
    %231 = math.tanh %230 : vector<2x128xf32>
    %232 = arith.subf %195, %231 : vector<2x128xf32>
    %233 = arith.mulf %226, %232 : vector<2x128xf32>
    %234 = arith.addf %231, %233 : vector<2x128xf32>
    %235 = arith.index_cast %c5_i32 : i32 to index
    %c0_48 = arith.constant 0 : index
    %c0_49 = arith.constant 0 : index
    %236 = vector.load %arg10[%235, %c0_48, %c0_49] : memref<8x2x128xf32, #tpu.memory_space<vmem>>, vector<1x2x128xf32>
    %237 = vector.shape_cast %236 : vector<1x2x128xf32> to vector<2x128xf32>
    %238 = vector.shape_cast %234 : vector<2x128xf32> to vector<1x2x128xf32>
    tpu.vector_store %arg10[%235, %c0_48, %c0_49], %238 {strides = array<i32>} : memref<8x2x128xf32, #tpu.memory_space<vmem>>, vector<1x2x128xf32>,
    %c6_i32 = arith.constant 6 : i32
    %239 = arith.index_cast %c6_i32 : i32 to index
    %c0_50 = arith.constant 0 : index
    %c0_51 = arith.constant 0 : index
    %240 = vector.load %arg0[%239, %c0_50, %c0_51] : memref<8x2x1xf32, #tpu.memory_space<vmem>>, vector<1x2x1xf32>
    %241 = vector.shape_cast %240 : vector<1x2x1xf32> to vector<2x1xf32>
    %242 = vector.broadcast %241 : vector<2x1xf32> to vector<2x384xf32>
    %243 = vector.broadcast %0 : vector<1x384xf32> to vector<2x384xf32>
    %244 = arith.mulf %242, %243 : vector<2x384xf32>
    %245 = vector.broadcast %2 : vector<1x384xf32> to vector<2x384xf32>
    %246 = arith.addf %244, %245 : vector<2x384xf32>
    %cst_52 = arith.constant dense<0.000000e+00> : vector<2x384xf32>
    %247 = tpu.matmul %234, %1, %cst_52 {dimension_numbers = #tpu.dot_dimension_numbers<[1], [0], [0], [1], [0, 0, 1, 1], [], []>} : vector<2x128xf32>, vector<128x384xf32>, vector<2x384xf32> -> vector<2x384xf32>
    %248 = vector.broadcast %3 : vector<1x384xf32> to vector<2x384xf32>
    %249 = arith.addf %247, %248 : vector<2x384xf32>
    %250 = vector.extract_strided_slice %246 {offsets = [0, 0], sizes = [2, 128], strides = [1, 1]} : vector<2x384xf32> to vector<2x128xf32>
    %251 = vector.extract_strided_slice %249 {offsets = [0, 0], sizes = [2, 128], strides = [1, 1]} : vector<2x384xf32> to vector<2x128xf32>
    %252 = arith.addf %250, %251 : vector<2x128xf32>
    %253 = arith.negf %252 : vector<2x128xf32>
    %254 = math.exp %253 : vector<2x128xf32>
    %cst_53 = arith.constant 1.000000e+00 : f32
    %255 = vector.broadcast %cst_53 : f32 to vector<2x128xf32>
    %256 = arith.addf %255, %254 : vector<2x128xf32>
    %257 = arith.divf %255, %256 : vector<2x128xf32>
    %258 = vector.extract_strided_slice %246 {offsets = [0, 128], sizes = [2, 128], strides = [1, 1]} : vector<2x384xf32> to vector<2x128xf32>
    %259 = vector.extract_strided_slice %249 {offsets = [0, 128], sizes = [2, 128], strides = [1, 1]} : vector<2x384xf32> to vector<2x128xf32>
    %260 = arith.addf %258, %259 : vector<2x128xf32>
    %261 = arith.negf %260 : vector<2x128xf32>
    %262 = math.exp %261 : vector<2x128xf32>
    %cst_54 = arith.constant 1.000000e+00 : f32
    %263 = vector.broadcast %cst_54 : f32 to vector<2x128xf32>
    %264 = arith.addf %263, %262 : vector<2x128xf32>
    %265 = arith.divf %263, %264 : vector<2x128xf32>
    %266 = vector.extract_strided_slice %246 {offsets = [0, 256], sizes = [2, 128], strides = [1, 1]} : vector<2x384xf32> to vector<2x128xf32>
    %267 = vector.extract_strided_slice %249 {offsets = [0, 256], sizes = [2, 128], strides = [1, 1]} : vector<2x384xf32> to vector<2x128xf32>
    %268 = arith.mulf %257, %267 : vector<2x128xf32>
    %269 = arith.addf %266, %268 : vector<2x128xf32>
    %270 = math.tanh %269 : vector<2x128xf32>
    %271 = arith.subf %234, %270 : vector<2x128xf32>
    %272 = arith.mulf %265, %271 : vector<2x128xf32>
    %273 = arith.addf %270, %272 : vector<2x128xf32>
    %274 = arith.index_cast %c6_i32 : i32 to index
    %c0_55 = arith.constant 0 : index
    %c0_56 = arith.constant 0 : index
    %275 = vector.load %arg10[%274, %c0_55, %c0_56] : memref<8x2x128xf32, #tpu.memory_space<vmem>>, vector<1x2x128xf32>
    %276 = vector.shape_cast %275 : vector<1x2x128xf32> to vector<2x128xf32>
    %277 = vector.shape_cast %273 : vector<2x128xf32> to vector<1x2x128xf32>
    tpu.vector_store %arg10[%274, %c0_55, %c0_56], %277 {strides = array<i32>} : memref<8x2x128xf32, #tpu.memory_space<vmem>>, vector<1x2x128xf32>,
    %c7_i32 = arith.constant 7 : i32
    %278 = arith.index_cast %c7_i32 : i32 to index
    %c0_57 = arith.constant 0 : index
    %c0_58 = arith.constant 0 : index
    %279 = vector.load %arg0[%278, %c0_57, %c0_58] : memref<8x2x1xf32, #tpu.memory_space<vmem>>, vector<1x2x1xf32>
    %280 = vector.shape_cast %279 : vector<1x2x1xf32> to vector<2x1xf32>
    %281 = vector.broadcast %280 : vector<2x1xf32> to vector<2x384xf32>
    %282 = vector.broadcast %0 : vector<1x384xf32> to vector<2x384xf32>
    %283 = arith.mulf %281, %282 : vector<2x384xf32>
    %284 = vector.broadcast %2 : vector<1x384xf32> to vector<2x384xf32>
    %285 = arith.addf %283, %284 : vector<2x384xf32>
    %cst_59 = arith.constant dense<0.000000e+00> : vector<2x384xf32>
    %286 = tpu.matmul %273, %1, %cst_59 {dimension_numbers = #tpu.dot_dimension_numbers<[1], [0], [0], [1], [0, 0, 1, 1], [], []>} : vector<2x128xf32>, vector<128x384xf32>, vector<2x384xf32> -> vector<2x384xf32>
    %287 = vector.broadcast %3 : vector<1x384xf32> to vector<2x384xf32>
    %288 = arith.addf %286, %287 : vector<2x384xf32>
    %289 = vector.extract_strided_slice %285 {offsets = [0, 0], sizes = [2, 128], strides = [1, 1]} : vector<2x384xf32> to vector<2x128xf32>
    %290 = vector.extract_strided_slice %288 {offsets = [0, 0], sizes = [2, 128], strides = [1, 1]} : vector<2x384xf32> to vector<2x128xf32>
    %291 = arith.addf %289, %290 : vector<2x128xf32>
    %292 = arith.negf %291 : vector<2x128xf32>
    %293 = math.exp %292 : vector<2x128xf32>
    %cst_60 = arith.constant 1.000000e+00 : f32
    %294 = vector.broadcast %cst_60 : f32 to vector<2x128xf32>
    %295 = arith.addf %294, %293 : vector<2x128xf32>
    %296 = arith.divf %294, %295 : vector<2x128xf32>
    %297 = vector.extract_strided_slice %285 {offsets = [0, 128], sizes = [2, 128], strides = [1, 1]} : vector<2x384xf32> to vector<2x128xf32>
    %298 = vector.extract_strided_slice %288 {offsets = [0, 128], sizes = [2, 128], strides = [1, 1]} : vector<2x384xf32> to vector<2x128xf32>
    %299 = arith.addf %297, %298 : vector<2x128xf32>
    %300 = arith.negf %299 : vector<2x128xf32>
    %301 = math.exp %300 : vector<2x128xf32>
    %cst_61 = arith.constant 1.000000e+00 : f32
    %302 = vector.broadcast %cst_61 : f32 to vector<2x128xf32>
    %303 = arith.addf %302, %301 : vector<2x128xf32>
    %304 = arith.divf %302, %303 : vector<2x128xf32>
    %305 = vector.extract_strided_slice %285 {offsets = [0, 256], sizes = [2, 128], strides = [1, 1]} : vector<2x384xf32> to vector<2x128xf32>
    %306 = vector.extract_strided_slice %288 {offsets = [0, 256], sizes = [2, 128], strides = [1, 1]} : vector<2x384xf32> to vector<2x128xf32>
    %307 = arith.mulf %296, %306 : vector<2x128xf32>
    %308 = arith.addf %305, %307 : vector<2x128xf32>
    %309 = math.tanh %308 : vector<2x128xf32>
    %310 = arith.subf %273, %309 : vector<2x128xf32>
    %311 = arith.mulf %304, %310 : vector<2x128xf32>
    %312 = arith.addf %309, %311 : vector<2x128xf32>
    %313 = arith.index_cast %c7_i32 : i32 to index
    %c0_62 = arith.constant 0 : index
    %c0_63 = arith.constant 0 : index
    %314 = vector.load %arg10[%313, %c0_62, %c0_63] : memref<8x2x128xf32, #tpu.memory_space<vmem>>, vector<1x2x128xf32>
    %315 = vector.shape_cast %314 : vector<1x2x128xf32> to vector<2x128xf32>
    %316 = vector.shape_cast %312 : vector<2x128xf32> to vector<1x2x128xf32>
    tpu.vector_store %arg10[%313, %c0_62, %c0_63], %316 {strides = array<i32>} : memref<8x2x128xf32, #tpu.memory_space<vmem>>, vector<1x2x128xf32>,
    %c8_i32 = arith.constant 8 : i32
    %c0_64 = arith.constant 0 : index
    %c0_65 = arith.constant 0 : index
    %317 = vector.load %arg9[%c0_64, %c0_65] : memref<2x128xf32, #tpu.memory_space<vmem>>, vector<2x128xf32>
    tpu.vector_store %arg9[%c0_64, %c0_65], %312 {strides = array<i32>} : memref<2x128xf32, #tpu.memory_space<vmem>>, vector<2x128xf32>,
    %c0_66 = arith.constant 0 : index
    %c0_67 = arith.constant 0 : index
    %c0_68 = arith.constant 0 : index
    %318 = vector.load %arg10[%c0_66, %c0_67, %c0_68] : memref<8x2x128xf32, #tpu.memory_space<vmem>>, vector<8x2x128xf32>
    %319 = tpu.transpose %318, [1, 0, 2] : vector<8x2x128xf32> -> vector<2x8x128xf32>
    %320 = vector.shape_cast %319 : vector<2x8x128xf32> to vector<16x128xf32>
    %c0_69 = arith.constant 0 : index
    %c0_70 = arith.constant 0 : index
    %321 = vector.load %arg6[%c0_69, %c0_70] : memref<128x1xf32, #tpu.memory_space<vmem>>, vector<128x1xf32>
    %cst_71 = arith.constant dense<0.000000e+00> : vector<16x1xf32>
    %322 = tpu.matmul %320, %321, %cst_71 {dimension_numbers = #tpu.dot_dimension_numbers<[1], [0], [0], [1], [0, 0, 1, 1], [], []>} : vector<16x128xf32>, vector<128x1xf32>, vector<16x1xf32> -> vector<16x1xf32>
    %c0_72 = arith.constant 0 : index
    %c0_73 = arith.constant 0 : index
    %323 = vector.load %arg7[%c0_72, %c0_73] : memref<1x1xf32, #tpu.memory_space<vmem>>, vector<1x1xf32>
    %324 = vector.broadcast %323 : vector<1x1xf32> to vector<16x1xf32>
    %325 = arith.addf %322, %324 : vector<16x1xf32>
    %c0_74 = arith.constant 0 : index
    %c0_75 = arith.constant 0 : index
    %326 = vector.load %arg8[%c0_74, %c0_75] : memref<16x1xf32, #tpu.memory_space<vmem>>, vector<16x1xf32>
    tpu.vector_store %arg8[%c0_74, %c0_75], %325 {strides = array<i32>} : memref<16x1xf32, #tpu.memory_space<vmem>>, vector<16x1xf32>,
    return
  }
}

</mosaic_0001>

<llo_original>
// kernel: rnn_model_forward.1
$region0: #{rnn_model_forward.1}
  #allocation0 [shape = 'u32[]', space=smem, size = 0x4, offset = 0x4, fixed_abs, tag = 'smem constant byte address 0x4 - core index']
  #allocation1 [shape = 'u32[144,128]{1,0:T(1,128)}', space=vmem, size = 0x12000, scoped, tag = 'internal scratch']
  #allocation2 [shape = 'f32[8,2,128]{2,1,0:T(2,128)}', space=vmem, size = 0x2000, scoped, tag = 'scratch operand']
  #allocation3 [shape = 'f32[1,1]{1,0:T(1,128)S(1)}', space=vmem, size = 0x200, scoped, tag = 'scoped memory for rnn_model_forward.1']
  %s0 = inlined_call_operand.vmem [shape: f32[8,2,1], index: 0, kind: input, shape index: {}]
  %s1 = inlined_call_operand.vmem [shape: f32[2,128], index: 1, kind: input, shape index: {}]
  %s2 = inlined_call_operand.vmem [shape: f32[1,384], index: 2, kind: input, shape index: {}]
  %s3 = inlined_call_operand.vmem [shape: f32[128,384], index: 3, kind: input, shape index: {}]
  %s4 = inlined_call_operand.vmem [shape: f32[1,384], index: 4, kind: input, shape index: {}]
  %s5 = inlined_call_operand.vmem [shape: f32[1,384], index: 5, kind: input, shape index: {}]
  %s6 = inlined_call_operand.vmem [shape: f32[128,1], index: 6, kind: input, shape index: {}]
  %s7 = inlined_call_operand.<no memory space> [shape: f32[1,1], index: 7, kind: input, shape index: {}]
  %s8 = inlined_call_operand.vmem [shape: f32[16,1], index: 8, kind: output, shape index: {0}]
  %s9 = inlined_call_operand.vmem [shape: f32[2,128], index: 9, kind: output, shape index: {1}]
  %10 = xla_tuple %s8, %s9
  %s11 = sld [smem:[#allocation0]]
  $region50: #{rnn_model_forward.1} parent=0
    _
  %s13 = ssub.s32 1, %s11
  %s14 = scalar_select 0, %s13, %s11
  %v15 = vstv %s7
  %16 = vst [vmem:[#allocation3] sm:$0x1] %v15
  // Predicated region
  $region2: #{rnn_model_forward.1} parent=0 // pred_check
    _
  $region3: #{rnn_model_forward.1} parent=0 // pred_check_branch
    %18 = sbr.rel (0) target = $region5
  $region4: #{rnn_model_forward.1} parent=0 // pred_region
    _
  $region5: #{rnn_model_forward.1} parent=0 // pred_fallthru
    _
  // Predicated region
  $region6: #{rnn_model_forward.1} parent=0 // pred_check
    _
  $region7: #{rnn_model_forward.1} parent=0 // pred_check_branch
    %20 = sbr.rel (0) target = $region9
  $region8: #{rnn_model_forward.1} parent=0 // pred_region
    _
  $region9: #{rnn_model_forward.1} parent=0 // pred_fallthru
    _
  // Predicated region
  $region10: #{rnn_model_forward.1} parent=0 // pred_check
    _
  $region11: #{rnn_model_forward.1} parent=0 // pred_check_branch
    %22 = sbr.rel (0) target = $region13
  $region12: #{rnn_model_forward.1} parent=0 // pred_region
    _
  $region13: #{rnn_model_forward.1} parent=0 // pred_fallthru
    _
  // Predicated region
  $region14: #{rnn_model_forward.1} parent=0 // pred_check
    _
  $region15: #{rnn_model_forward.1} parent=0 // pred_check_branch
    %24 = sbr.rel (0) target = $region17
  $region16: #{rnn_model_forward.1} parent=0 // pred_region
    _
  $region17: #{rnn_model_forward.1} parent=0 // pred_fallthru
    _
  // Predicated region
  $region18: #{rnn_model_forward.1} parent=0 // pred_check
    _
  $region19: #{rnn_model_forward.1} parent=0 // pred_check_branch
    %26 = sbr.rel (0) target = $region21
  $region20: #{rnn_model_forward.1} parent=0 // pred_region
    _
  $region21: #{rnn_model_forward.1} parent=0 // pred_fallthru
    _
  // Predicated region
  $region22: #{rnn_model_forward.1} parent=0 // pred_check
    _
  $region23: #{rnn_model_forward.1} parent=0 // pred_check_branch
    %28 = sbr.rel (0) target = $region25
  $region24: #{rnn_model_forward.1} parent=0 // pred_region
    _
  $region25: #{rnn_model_forward.1} parent=0 // pred_fallthru
    _
  // Predicated region
  $region26: #{rnn_model_forward.1} parent=0 // pred_check
    _
  $region27: #{rnn_model_forward.1} parent=0 // pred_check_branch
    %30 = sbr.rel (0) target = $region29
  $region28: #{rnn_model_forward.1} parent=0 // pred_region
    _
  $region29: #{rnn_model_forward.1} parent=0 // pred_fallthru
    _
  // Predicated region
  $region30: #{rnn_model_forward.1} parent=0 // pred_check
    _
  $region31: #{rnn_model_forward.1} parent=0 // pred_check_branch
    %32 = sbr.rel (0) target = $region33
  $region32: #{rnn_model_forward.1} parent=0 // pred_region
    _
  $region33: #{rnn_model_forward.1} parent=0 // pred_fallthru
    _
  %v33 = vld [vmem:[%s2] sm:$0x7]
  %v34 = vld [vmem:[%s3] sm:$0xff]
  %v35 = vld [vmem:[%s3 + $0x8] sm:$0xff]
  %v36 = vld [vmem:[%s3 + $0x10] sm:$0xff]
  %v37 = vld [vmem:[%s3 + $0x18] sm:$0xff]
  %v38 = vld [vmem:[%s3 + $0x20] sm:$0xff]
  %v39 = vld [vmem:[%s3 + $0x28] sm:$0xff]
  %v40 = vld [vmem:[%s3 + $0x30] sm:$0xff]
  %v41 = vld [vmem:[%s3 + $0x38] sm:$0xff]
  %v42 = vld [vmem:[%s3 + $0x40] sm:$0xff]
  %v43 = vld [vmem:[%s3 + $0x48] sm:$0xff]
  %v44 = vld [vmem:[%s3 + $0x50] sm:$0xff]
  %v45 = vld [vmem:[%s3 + $0x58] sm:$0xff]
  %v46 = vld [vmem:[%s3 + $0x60] sm:$0xff]
  %v47 = vld [vmem:[%s3 + $0x68] sm:$0xff]
  %v48 = vld [vmem:[%s3 + $0x70] sm:$0xff]
  %v49 = vld [vmem:[%s3 + $0x78] sm:$0xff]
  %v50 = vld [vmem:[%s3 + $0x80] sm:$0xff]
  %v51 = vld [vmem:[%s3 + $0x88] sm:$0xff]
  %v52 = vld [vmem:[%s3 + $0x90] sm:$0xff]
  %v53 = vld [vmem:[%s3 + $0x98] sm:$0xff]
  %v54 = vld [vmem:[%s3 + $0xa0] sm:$0xff]
  %v55 = vld [vmem:[%s3 + $0xa8] sm:$0xff]
  %v56 = vld [vmem:[%s3 + $0xb0] sm:$0xff]
  %v57 = vld [vmem:[%s3 + $0xb8] sm:$0xff]
  %v58 = vld [vmem:[%s3 + $0xc0] sm:$0xff]
  %v59 = vld [vmem:[%s3 + $0xc8] sm:$0xff]
  %v60 = vld [vmem:[%s3 + $0xd0] sm:$0xff]
  %v61 = vld [vmem:[%s3 + $0xd8] sm:$0xff]
  %v62 = vld [vmem:[%s3 + $0xe0] sm:$0xff]
  %v63 = vld [vmem:[%s3 + $0xe8] sm:$0xff]
  %v64 = vld [vmem:[%s3 + $0xf0] sm:$0xff]
  %v65 = vld [vmem:[%s3 + $0xf8] sm:$0xff]
  %v66 = vld [vmem:[%s3 + $0x100] sm:$0xff]
  %v67 = vld [vmem:[%s3 + $0x108] sm:$0xff]
  %v68 = vld [vmem:[%s3 + $0x110] sm:$0xff]
  %v69 = vld [vmem:[%s3 + $0x118] sm:$0xff]
  %v70 = vld [vmem:[%s3 + $0x120] sm:$0xff]
  %v71 = vld [vmem:[%s3 + $0x128] sm:$0xff]
  %v72 = vld [vmem:[%s3 + $0x130] sm:$0xff]
  %v73 = vld [vmem:[%s3 + $0x138] sm:$0xff]
  %v74 = vld [vmem:[%s3 + $0x140] sm:$0xff]
  %v75 = vld [vmem:[%s3 + $0x148] sm:$0xff]
  %v76 = vld [vmem:[%s3 + $0x150] sm:$0xff]
  %v77 = vld [vmem:[%s3 + $0x158] sm:$0xff]
  %v78 = vld [vmem:[%s3 + $0x160] sm:$0xff]
  %v79 = vld [vmem:[%s3 + $0x168] sm:$0xff]
  %v80 = vld [vmem:[%s3 + $0x170] sm:$0xff]
  %v81 = vld [vmem:[%s3 + $0x178] sm:$0xff]
  %v82 = vld [vmem:[%s4] sm:$0x7]
  %v83 = vld [vmem:[%s5] sm:$0x7]
  %v84 = vld [vmem:[%s1] sm:$0x3]
  %v85 = vld [vmem:[%s0] sm:$0x3]
  %87 = vset.pattern.permute.xlu0 0
  %88 = vperm.xlu0 %87, %v85
  %v89 = vpop.permute.xlu0 %88
  %v92 = vlaneseq
  %v93 = vshrl.u32 %v92, 7
  %v94 = vsub.s32 0, %v93
  %v95 = vrot.slane %v33, %v94
  %v96 = vlaneseq
  %v97 = vshrl.u32 %v96, 7
  %v98 = vsub.s32 1, %v97
  %v99 = vrot.slane %v33, %v98
  %v100 = vlaneseq
  %v101 = vshrl.u32 %v100, 7
  %v102 = vsub.s32 2, %v101
  %v103 = vrot.slane %v33, %v102
  %v107 = vmul.f32 %v89, %v95
  %v108 = vmul.f32 %v89, %v99
  %v109 = vmul.f32 %v89, %v103
  %v111 = vlaneseq
  %v112 = vshrl.u32 %v111, 7
  %v113 = vsub.s32 0, %v112
  %v114 = vrot.slane %v82, %v113
  %v115 = vlaneseq
  %v116 = vshrl.u32 %v115, 7
  %v117 = vsub.s32 1, %v116
  %v118 = vrot.slane %v82, %v117
  %v119 = vlaneseq
  %v120 = vshrl.u32 %v119, 7
  %v121 = vsub.s32 2, %v120
  %v122 = vrot.slane %v82, %v121
  %v126 = vadd.f32 %v107, %v114
  %v127 = vadd.f32 %v108, %v118
  %v128 = vadd.f32 %v109, %v122
  %v130 = vlaneseq
  %v131 = vshrl.u32 %v130, 7
  %v132 = vsub.s32 0, %v131
  %v133 = vrot.slane %v83, %v132
  %v134 = vlaneseq
  %v135 = vshrl.u32 %v134, 7
  %v136 = vsub.s32 1, %v135
  %v137 = vrot.slane %v83, %v136
  %v138 = vlaneseq
  %v139 = vshrl.u32 %v138, 7
  %v140 = vsub.s32 2, %v139
  %v141 = vrot.slane %v83, %v140
  %145 = vmatprep.subr.mxu0 %v35
  %146 = vmatpush1.msra.mxu0 %v34
  %147 = vmatprep.subr.mxu0 %v38
  %148 = vmatpush1.msra.mxu0 %v37
  %149 = vmatprep.subr.mxu0 %v41
  %150 = vmatpush1.msra.mxu0 %v40
  %151 = vmatprep.subr.mxu0 %v44
  %152 = vmatpush1.msra.mxu0 %v43
  %153 = vmatprep.subr.mxu0 %v47
  %154 = vmatpush1.msra.mxu0 %v46
  %155 = vmatprep.subr.mxu0 %v50
  %156 = vmatpush1.msra.mxu0 %v49
  %157 = vmatprep.subr.mxu0 %v53
  %158 = vmatpush1.msra.mxu0 %v52
  %159 = vmatprep.subr.mxu0 %v56
  %160 = vmatpush1.msra.mxu0 %v55
  %161 = vmatprep.subr.mxu0 %v59
  %162 = vmatpush1.msra.mxu0 %v58
  %163 = vmatprep.subr.mxu0 %v62
  %164 = vmatpush1.msra.mxu0 %v61
  %165 = vmatprep.subr.mxu0 %v65
  %166 = vmatpush1.msra.mxu0 %v64
  %167 = vmatprep.subr.mxu0 %v68
  %168 = vmatpush1.msra.mxu0 %v67
  %169 = vmatprep.subr.mxu0 %v71
  %170 = vmatpush1.msra.mxu0 %v70
  %171 = vmatprep.subr.mxu0 %v74
  %172 = vmatpush1.msra.mxu0 %v73
  %173 = vmatprep.subr.mxu0 %v77
  %174 = vmatpush1.msra.mxu0 %v76
  %175 = vmatprep.subr.mxu0 %v80
  %176 = vmatpush1.msra.mxu0 %v79
  %177 = vmatprep.subr.mxu0 0.0
  %178 = vmatpush1.msra.mxu0 0.0
  %179 = vmatprep.subr.mxu0 0.0
  %180 = vmatpush1.msra.mxu0 0.0
  %181 = vmatprep.subr.mxu0 0.0
  %182 = vmatpush1.msra.mxu0 0.0
  %183 = vmatprep.subr.mxu0 0.0
  %184 = vmatpush1.msra.mxu0 0.0
  %185 = vmatprep.subr.mxu0 0.0
  %186 = vmatpush1.msra.mxu0 0.0
  %187 = vmatprep.subr.mxu0 0.0
  %188 = vmatpush1.msra.mxu0 0.0
  %189 = vmatprep.subr.mxu0 0.0
  %190 = vmatpush1.msra.mxu0 0.0
  %191 = vmatprep.subr.mxu0 0.0
  %192 = vmatpush1.msra.mxu0 0.0
  %193 = vmatprep.subr.mxu0 0.0
  %194 = vmatpush1.msra.mxu0 0.0
  %195 = vmatprep.subr.mxu0 0.0
  %196 = vmatpush1.msra.mxu0 0.0
  %197 = vmatprep.subr.mxu0 0.0
  %198 = vmatpush1.msra.mxu0 0.0
  %199 = vmatprep.subr.mxu0 0.0
  %200 = vmatpush1.msra.mxu0 0.0
  %201 = vmatprep.subr.mxu0 0.0
  %202 = vmatpush1.msra.mxu0 0.0
  %203 = vmatprep.subr.mxu0 0.0
  %204 = vmatpush1.msra.mxu0 0.0
  %205 = vmatprep.subr.mxu0 0.0
  %206 = vmatpush1.msra.mxu0 0.0
  %207 = vmatprep.subr.mxu0 0.0
  %208 = vmatpush1.msra.mxu0 0.0
  %209 = vmatprep.mubr.f32.mxu0 0.0
  %210 = vmatmul.mubr.f32.gmra.mrb[0].mxu0 %v84
  %v211 = vpop.f32.mrb[0].mxu0
  %v212 = vadd.f32 %v133, %v211
  %v213 = vpop.f32.mrb[0].mxu0
  %v214 = vadd.f32 %v137, %v213
  %215 = vdwg.mxu0
  %216 = vmatprep.subr.mxu0 0.0
  %217 = vmatpush1.msra.mxu0 %v36
  %218 = vmatprep.subr.mxu0 0.0
  %219 = vmatpush1.msra.mxu0 %v39
  %220 = vmatprep.subr.mxu0 0.0
  %221 = vmatpush1.msra.mxu0 %v42
  %222 = vmatprep.subr.mxu0 0.0
  %223 = vmatpush1.msra.mxu0 %v45
  %224 = vmatprep.subr.mxu0 0.0
  %225 = vmatpush1.msra.mxu0 %v48
  %226 = vmatprep.subr.mxu0 0.0
  %227 = vmatpush1.msra.mxu0 %v51
  %228 = vmatprep.subr.mxu0 0.0
  %229 = vmatpush1.msra.mxu0 %v54
  %230 = vmatprep.subr.mxu0 0.0
  %231 = vmatpush1.msra.mxu0 %v57
  %232 = vmatprep.subr.mxu0 0.0
  %233 = vmatpush1.msra.mxu0 %v60
  %234 = vmatprep.subr.mxu0 0.0
  %235 = vmatpush1.msra.mxu0 %v63
  %236 = vmatprep.subr.mxu0 0.0
  %237 = vmatpush1.msra.mxu0 %v66
  %238 = vmatprep.subr.mxu0 0.0
  %239 = vmatpush1.msra.mxu0 %v69
  %240 = vmatprep.subr.mxu0 0.0
  %241 = vmatpush1.msra.mxu0 %v72
  %242 = vmatprep.subr.mxu0 0.0
  %243 = vmatpush1.msra.mxu0 %v75
  %244 = vmatprep.subr.mxu0 0.0
  %245 = vmatpush1.msra.mxu0 %v78
  %246 = vmatprep.subr.mxu0 0.0
  %247 = vmatpush1.msra.mxu0 %v81
  %248 = vmatprep.subr.mxu0 0.0
  %249 = vmatpush1.msra.mxu0 0.0
  %250 = vmatprep.subr.mxu0 0.0
  %251 = vmatpush1.msra.mxu0 0.0
  %252 = vmatprep.subr.mxu0 0.0
  %253 = vmatpush1.msra.mxu0 0.0
  %254 = vmatprep.subr.mxu0 0.0
  %255 = vmatpush1.msra.mxu0 0.0
  %256 = vmatprep.subr.mxu0 0.0
  %257 = vmatpush1.msra.mxu0 0.0
  %258 = vmatprep.subr.mxu0 0.0
  %259 = vmatpush1.msra.mxu0 0.0
  %260 = vmatprep.subr.mxu0 0.0
  %261 = vmatpush1.msra.mxu0 0.0
  %262 = vmatprep.subr.mxu0 0.0
  %263 = vmatpush1.msra.mxu0 0.0
  %264 = vmatprep.subr.mxu0 0.0
  %265 = vmatpush1.msra.mxu0 0.0
  %266 = vmatprep.subr.mxu0 0.0
  %267 = vmatpush1.msra.mxu0 0.0
  %268 = vmatprep.subr.mxu0 0.0
  %269 = vmatpush1.msra.mxu0 0.0
  %270 = vmatprep.subr.mxu0 0.0
  %271 = vmatpush1.msra.mxu0 0.0
  %272 = vmatprep.subr.mxu0 0.0
  %273 = vmatpush1.msra.mxu0 0.0
  %274 = vmatprep.subr.mxu0 0.0
  %275 = vmatpush1.msra.mxu0 0.0
  %276 = vmatprep.subr.mxu0 0.0
  %277 = vmatpush1.msra.mxu0 0.0
  %278 = vmatprep.subr.mxu0 0.0
  %279 = vmatpush1.msra.mxu0 0.0
  %280 = vmatprep.mubr.f32.mxu0 0.0
  %281 = vmatmul.mubr.f32.gmra.mrb[0].mxu0 %v84
  %v282 = vpop.f32.mrb[0].mxu0
  %v283 = vadd.f32 %v141, %v282
  %v284 = vpop.f32.mrb[0].mxu0
  %285 = vdwg.mxu0
  %v286 = vadd.f32 %v126, %v212
  %v287 = vxor.u32 %v286, 2147483648
  %v288 = vmul.f32 %v287, 1.442695
  %v289 = vpow.pop %v288
  %v290 = vadd.f32 %v289, 1.0
  %v291 = vrcp.pop %v290
  %v292 = vmul.f32 1.0, %v291
  %v293 = vadd.f32 %v127, %v214
  %v294 = vxor.u32 %v293, 2147483648
  %v295 = vmul.f32 %v294, 1.442695
  %v296 = vpow.pop %v295
  %v297 = vadd.f32 %v296, 1.0
  %v298 = vrcp.pop %v297
  %v299 = vmul.f32 1.0, %v298
  %v300 = vmul.f32 %v292, %v283
  %v301 = vadd.f32 %v128, %v300
  %v302 = vtanh.pop %v301
  %v303 = vsub.f32 %v84, %v302
  %v304 = vmul.f32 %v299, %v303
  %v305 = vadd.f32 %v302, %v304
  %306 = vst [vmem:[#allocation2] sm:$0x3] %v305
  %s307 = scalar_lea.vmem %s0, 2
  %v308 = vld [vmem:[%s307] sm:$0x3]
  %310 = vset.pattern.permute.xlu0 0
  %311 = vperm.xlu0 %310, %v308
  %v312 = vpop.permute.xlu0 %311
  %v314 = vmul.f32 %v312, %v95
  %v315 = vmul.f32 %v312, %v99
  %v316 = vmul.f32 %v312, %v103
  %v317 = vadd.f32 %v314, %v114
  %v318 = vadd.f32 %v315, %v118
  %v319 = vadd.f32 %v316, %v122
  %320 = vmatprep.subr.mxu0 %v35
  %321 = vmatpush1.msra.mxu0 %v34
  %322 = vmatprep.subr.mxu0 %v38
  %323 = vmatpush1.msra.mxu0 %v37
  %324 = vmatprep.subr.mxu0 %v41
  %325 = vmatpush1.msra.mxu0 %v40
  %326 = vmatprep.subr.mxu0 %v44
  %327 = vmatpush1.msra.mxu0 %v43
  %328 = vmatprep.subr.mxu0 %v47
  %329 = vmatpush1.msra.mxu0 %v46
  %330 = vmatprep.subr.mxu0 %v50
  %331 = vmatpush1.msra.mxu0 %v49
  %332 = vmatprep.subr.mxu0 %v53
  %333 = vmatpush1.msra.mxu0 %v52
  %334 = vmatprep.subr.mxu0 %v56
  %335 = vmatpush1.msra.mxu0 %v55
  %336 = vmatprep.subr.mxu0 %v59
  %337 = vmatpush1.msra.mxu0 %v58
  %338 = vmatprep.subr.mxu0 %v62
  %339 = vmatpush1.msra.mxu0 %v61
  %340 = vmatprep.subr.mxu0 %v65
  %341 = vmatpush1.msra.mxu0 %v64
  %342 = vmatprep.subr.mxu0 %v68
  %343 = vmatpush1.msra.mxu0 %v67
  %344 = vmatprep.subr.mxu0 %v71
  %345 = vmatpush1.msra.mxu0 %v70
  %346 = vmatprep.subr.mxu0 %v74
  %347 = vmatpush1.msra.mxu0 %v73
  %348 = vmatprep.subr.mxu0 %v77
  %349 = vmatpush1.msra.mxu0 %v76
  %350 = vmatprep.subr.mxu0 %v80
  %351 = vmatpush1.msra.mxu0 %v79
  %352 = vmatprep.subr.mxu0 0.0
  %353 = vmatpush1.msra.mxu0 0.0
  %354 = vmatprep.subr.mxu0 0.0
  %355 = vmatpush1.msra.mxu0 0.0
  %356 = vmatprep.subr.mxu0 0.0
  %357 = vmatpush1.msra.mxu0 0.0
  %358 = vmatprep.subr.mxu0 0.0
  %359 = vmatpush1.msra.mxu0 0.0
  %360 = vmatprep.subr.mxu0 0.0
  %361 = vmatpush1.msra.mxu0 0.0
  %362 = vmatprep.subr.mxu0 0.0
  %363 = vmatpush1.msra.mxu0 0.0
  %364 = vmatprep.subr.mxu0 0.0
  %365 = vmatpush1.msra.mxu0 0.0
  %366 = vmatprep.subr.mxu0 0.0
  %367 = vmatpush1.msra.mxu0 0.0
  %368 = vmatprep.subr.mxu0 0.0
  %369 = vmatpush1.msra.mxu0 0.0
  %370 = vmatprep.subr.mxu0 0.0
  %371 = vmatpush1.msra.mxu0 0.0
  %372 = vmatprep.subr.mxu0 0.0
  %373 = vmatpush1.msra.mxu0 0.0
  %374 = vmatprep.subr.mxu0 0.0
  %375 = vmatpush1.msra.mxu0 0.0
  %376 = vmatprep.subr.mxu0 0.0
  %377 = vmatpush1.msra.mxu0 0.0
  %378 = vmatprep.subr.mxu0 0.0
  %379 = vmatpush1.msra.mxu0 0.0
  %380 = vmatprep.subr.mxu0 0.0
  %381 = vmatpush1.msra.mxu0 0.0
  %382 = vmatprep.subr.mxu0 0.0
  %383 = vmatpush1.msra.mxu0 0.0
  %384 = vmatprep.mubr.f32.mxu0 0.0
  %385 = vmatmul.mubr.f32.gmra.mrb[0].mxu0 %v305
  %v386 = vpop.f32.mrb[0].mxu0
  %v387 = vadd.f32 %v133, %v386
  %v388 = vpop.f32.mrb[0].mxu0
  %v389 = vadd.f32 %v137, %v388
  %390 = vdwg.mxu0
  %391 = vmatprep.subr.mxu0 0.0
  %392 = vmatpush1.msra.mxu0 %v36
  %393 = vmatprep.subr.mxu0 0.0
  %394 = vmatpush1.msra.mxu0 %v39
  %395 = vmatprep.subr.mxu0 0.0
  %396 = vmatpush1.msra.mxu0 %v42
  %397 = vmatprep.subr.mxu0 0.0
  %398 = vmatpush1.msra.mxu0 %v45
  %399 = vmatprep.subr.mxu0 0.0
  %400 = vmatpush1.msra.mxu0 %v48
  %401 = vmatprep.subr.mxu0 0.0
  %402 = vmatpush1.msra.mxu0 %v51
  %403 = vmatprep.subr.mxu0 0.0
  %404 = vmatpush1.msra.mxu0 %v54
  %405 = vmatprep.subr.mxu0 0.0
  %406 = vmatpush1.msra.mxu0 %v57
  %407 = vmatprep.subr.mxu0 0.0
  %408 = vmatpush1.msra.mxu0 %v60
  %409 = vmatprep.subr.mxu0 0.0
  %410 = vmatpush1.msra.mxu0 %v63
  %411 = vmatprep.subr.mxu0 0.0
  %412 = vmatpush1.msra.mxu0 %v66
  %413 = vmatprep.subr.mxu0 0.0
  %414 = vmatpush1.msra.mxu0 %v69
  %415 = vmatprep.subr.mxu0 0.0
  %416 = vmatpush1.msra.mxu0 %v72
  %417 = vmatprep.subr.mxu0 0.0
  %418 = vmatpush1.msra.mxu0 %v75
  %419 = vmatprep.subr.mxu0 0.0
  %420 = vmatpush1.msra.mxu0 %v78
  %421 = vmatprep.subr.mxu0 0.0
  %422 = vmatpush1.msra.mxu0 %v81
  %423 = vmatprep.subr.mxu0 0.0
  %424 = vmatpush1.msra.mxu0 0.0
  %425 = vmatprep.subr.mxu0 0.0
  %426 = vmatpush1.msra.mxu0 0.0
  %427 = vmatprep.subr.mxu0 0.0
  %428 = vmatpush1.msra.mxu0 0.0
  %429 = vmatprep.subr.mxu0 0.0
  %430 = vmatpush1.msra.mxu0 0.0
  %431 = vmatprep.subr.mxu0 0.0
  %432 = vmatpush1.msra.mxu0 0.0
  %433 = vmatprep.subr.mxu0 0.0
  %434 = vmatpush1.msra.mxu0 0.0
  %435 = vmatprep.subr.mxu0 0.0
  %436 = vmatpush1.msra.mxu0 0.0
  %437 = vmatprep.subr.mxu0 0.0
  %438 = vmatpush1.msra.mxu0 0.0
  %439 = vmatprep.subr.mxu0 0.0
  %440 = vmatpush1.msra.mxu0 0.0
  %441 = vmatprep.subr.mxu0 0.0
  %442 = vmatpush1.msra.mxu0 0.0
  %443 = vmatprep.subr.mxu0 0.0
  %444 = vmatpush1.msra.mxu0 0.0
  %445 = vmatprep.subr.mxu0 0.0
  %446 = vmatpush1.msra.mxu0 0.0
  %447 = vmatprep.subr.mxu0 0.0
  %448 = vmatpush1.msra.mxu0 0.0
  %449 = vmatprep.subr.mxu0 0.0
  %450 = vmatpush1.msra.mxu0 0.0
  %451 = vmatprep.subr.mxu0 0.0
  %452 = vmatpush1.msra.mxu0 0.0
  %453 = vmatprep.subr.mxu0 0.0
  %454 = vmatpush1.msra.mxu0 0.0
  %455 = vmatprep.mubr.f32.mxu0 0.0
  %456 = vmatmul.mubr.f32.gmra.mrb[0].mxu0 %v305
  %v457 = vpop.f32.mrb[0].mxu0
  %v458 = vadd.f32 %v141, %v457
  %v459 = vpop.f32.mrb[0].mxu0
  %460 = vdwg.mxu0
  %v461 = vadd.f32 %v317, %v387
  %v462 = vxor.u32 %v461, 2147483648
  %v463 = vmul.f32 %v462, 1.442695
  %v464 = vpow.pop %v463
  %v465 = vadd.f32 %v464, 1.0
  %v466 = vrcp.pop %v465
  %v467 = vmul.f32 1.0, %v466
  %v468 = vadd.f32 %v318, %v389
  %v469 = vxor.u32 %v468, 2147483648
  %v470 = vmul.f32 %v469, 1.442695
  %v471 = vpow.pop %v470
  %v472 = vadd.f32 %v471, 1.0
  %v473 = vrcp.pop %v472
  %v474 = vmul.f32 1.0, %v473
  %v475 = vmul.f32 %v467, %v458
  %v476 = vadd.f32 %v319, %v475
  %v477 = vtanh.pop %v476
  %v478 = vsub.f32 %v305, %v477
  %v479 = vmul.f32 %v474, %v478
  %v480 = vadd.f32 %v477, %v479
  %s481 = scalar_lea.vmem [#allocation2], 2
  %482 = vst [vmem:[%s481] sm:$0x3] %v480
  %s483 = scalar_lea.vmem %s0, 4
  %v484 = vld [vmem:[%s483] sm:$0x3]
  %486 = vset.pattern.permute.xlu0 0
  %487 = vperm.xlu0 %486, %v484
  %v488 = vpop.permute.xlu0 %487
  %v490 = vmul.f32 %v488, %v95
  %v491 = vmul.f32 %v488, %v99
  %v492 = vmul.f32 %v488, %v103
  %v493 = vadd.f32 %v490, %v114
  %v494 = vadd.f32 %v491, %v118
  %v495 = vadd.f32 %v492, %v122
  %496 = vmatprep.subr.mxu0 %v35
  %497 = vmatpush1.msra.mxu0 %v34
  %498 = vmatprep.subr.mxu0 %v38
  %499 = vmatpush1.msra.mxu0 %v37
  %500 = vmatprep.subr.mxu0 %v41
  %501 = vmatpush1.msra.mxu0 %v40
  %502 = vmatprep.subr.mxu0 %v44
  %503 = vmatpush1.msra.mxu0 %v43
  %504 = vmatprep.subr.mxu0 %v47
  %505 = vmatpush1.msra.mxu0 %v46
  %506 = vmatprep.subr.mxu0 %v50
  %507 = vmatpush1.msra.mxu0 %v49
  %508 = vmatprep.subr.mxu0 %v53
  %509 = vmatpush1.msra.mxu0 %v52
  %510 = vmatprep.subr.mxu0 %v56
  %511 = vmatpush1.msra.mxu0 %v55
  %512 = vmatprep.subr.mxu0 %v59
  %513 = vmatpush1.msra.mxu0 %v58
  %514 = vmatprep.subr.mxu0 %v62
  %515 = vmatpush1.msra.mxu0 %v61
  %516 = vmatprep.subr.mxu0 %v65
  %517 = vmatpush1.msra.mxu0 %v64
  %518 = vmatprep.subr.mxu0 %v68
  %519 = vmatpush1.msra.mxu0 %v67
  %520 = vmatprep.subr.mxu0 %v71
  %521 = vmatpush1.msra.mxu0 %v70
  %522 = vmatprep.subr.mxu0 %v74
  %523 = vmatpush1.msra.mxu0 %v73
  %524 = vmatprep.subr.mxu0 %v77
  %525 = vmatpush1.msra.mxu0 %v76
  %526 = vmatprep.subr.mxu0 %v80
  %527 = vmatpush1.msra.mxu0 %v79
  %528 = vmatprep.subr.mxu0 0.0
  %529 = vmatpush1.msra.mxu0 0.0
  %530 = vmatprep.subr.mxu0 0.0
  %531 = vmatpush1.msra.mxu0 0.0
  %532 = vmatprep.subr.mxu0 0.0
  %533 = vmatpush1.msra.mxu0 0.0
  %534 = vmatprep.subr.mxu0 0.0
  %535 = vmatpush1.msra.mxu0 0.0
  %536 = vmatprep.subr.mxu0 0.0
  %537 = vmatpush1.msra.mxu0 0.0
  %538 = vmatprep.subr.mxu0 0.0
  %539 = vmatpush1.msra.mxu0 0.0
  %540 = vmatprep.subr.mxu0 0.0
  %541 = vmatpush1.msra.mxu0 0.0
  %542 = vmatprep.subr.mxu0 0.0
  %543 = vmatpush1.msra.mxu0 0.0
  %544 = vmatprep.subr.mxu0 0.0
  %545 = vmatpush1.msra.mxu0 0.0
  %546 = vmatprep.subr.mxu0 0.0
  %547 = vmatpush1.msra.mxu0 0.0
  %548 = vmatprep.subr.mxu0 0.0
  %549 = vmatpush1.msra.mxu0 0.0
  %550 = vmatprep.subr.mxu0 0.0
  %551 = vmatpush1.msra.mxu0 0.0
  %552 = vmatprep.subr.mxu0 0.0
  %553 = vmatpush1.msra.mxu0 0.0
  %554 = vmatprep.subr.mxu0 0.0
  %555 = vmatpush1.msra.mxu0 0.0
  %556 = vmatprep.subr.mxu0 0.0
  %557 = vmatpush1.msra.mxu0 0.0
  %558 = vmatprep.subr.mxu0 0.0
  %559 = vmatpush1.msra.mxu0 0.0
  %560 = vmatprep.mubr.f32.mxu0 0.0
  %561 = vmatmul.mubr.f32.gmra.mrb[0].mxu0 %v480
  %v562 = vpop.f32.mrb[0].mxu0
  %v563 = vadd.f32 %v133, %v562
  %v564 = vpop.f32.mrb[0].mxu0
  %v565 = vadd.f32 %v137, %v564
  %566 = vdwg.mxu0
  %567 = vmatprep.subr.mxu0 0.0
  %568 = vmatpush1.msra.mxu0 %v36
  %569 = vmatprep.subr.mxu0 0.0
  %570 = vmatpush1.msra.mxu0 %v39
  %571 = vmatprep.subr.mxu0 0.0
  %572 = vmatpush1.msra.mxu0 %v42
  %573 = vmatprep.subr.mxu0 0.0
  %574 = vmatpush1.msra.mxu0 %v45
  %575 = vmatprep.subr.mxu0 0.0
  %576 = vmatpush1.msra.mxu0 %v48
  %577 = vmatprep.subr.mxu0 0.0
  %578 = vmatpush1.msra.mxu0 %v51
  %579 = vmatprep.subr.mxu0 0.0
  %580 = vmatpush1.msra.mxu0 %v54
  %581 = vmatprep.subr.mxu0 0.0
  %582 = vmatpush1.msra.mxu0 %v57
  %583 = vmatprep.subr.mxu0 0.0
  %584 = vmatpush1.msra.mxu0 %v60
  %585 = vmatprep.subr.mxu0 0.0
  %586 = vmatpush1.msra.mxu0 %v63
  %587 = vmatprep.subr.mxu0 0.0
  %588 = vmatpush1.msra.mxu0 %v66
  %589 = vmatprep.subr.mxu0 0.0
  %590 = vmatpush1.msra.mxu0 %v69
  %591 = vmatprep.subr.mxu0 0.0
  %592 = vmatpush1.msra.mxu0 %v72
  %593 = vmatprep.subr.mxu0 0.0
  %594 = vmatpush1.msra.mxu0 %v75
  %595 = vmatprep.subr.mxu0 0.0
  %596 = vmatpush1.msra.mxu0 %v78
  %597 = vmatprep.subr.mxu0 0.0
  %598 = vmatpush1.msra.mxu0 %v81
  %599 = vmatprep.subr.mxu0 0.0
  %600 = vmatpush1.msra.mxu0 0.0
  %601 = vmatprep.subr.mxu0 0.0
  %602 = vmatpush1.msra.mxu0 0.0
  %603 = vmatprep.subr.mxu0 0.0
  %604 = vmatpush1.msra.mxu0 0.0
  %605 = vmatprep.subr.mxu0 0.0
  %606 = vmatpush1.msra.mxu0 0.0
  %607 = vmatprep.subr.mxu0 0.0
  %608 = vmatpush1.msra.mxu0 0.0
  %609 = vmatprep.subr.mxu0 0.0
  %610 = vmatpush1.msra.mxu0 0.0
  %611 = vmatprep.subr.mxu0 0.0
  %612 = vmatpush1.msra.mxu0 0.0
  %613 = vmatprep.subr.mxu0 0.0
  %614 = vmatpush1.msra.mxu0 0.0
  %615 = vmatprep.subr.mxu0 0.0
  %616 = vmatpush1.msra.mxu0 0.0
  %617 = vmatprep.subr.mxu0 0.0
  %618 = vmatpush1.msra.mxu0 0.0
  %619 = vmatprep.subr.mxu0 0.0
  %620 = vmatpush1.msra.mxu0 0.0
  %621 = vmatprep.subr.mxu0 0.0
  %622 = vmatpush1.msra.mxu0 0.0
  %623 = vmatprep.subr.mxu0 0.0
  %624 = vmatpush1.msra.mxu0 0.0
  %625 = vmatprep.subr.mxu0 0.0
  %626 = vmatpush1.msra.mxu0 0.0
  %627 = vmatprep.subr.mxu0 0.0
  %628 = vmatpush1.msra.mxu0 0.0
  %629 = vmatprep.subr.mxu0 0.0
  %630 = vmatpush1.msra.mxu0 0.0
  %631 = vmatprep.mubr.f32.mxu0 0.0
  %632 = vmatmul.mubr.f32.gmra.mrb[0].mxu0 %v480
  %v633 = vpop.f32.mrb[0].mxu0
  %v634 = vadd.f32 %v141, %v633
  %v635 = vpop.f32.mrb[0].mxu0
  %636 = vdwg.mxu0
  %v637 = vadd.f32 %v493, %v563
  %v638 = vxor.u32 %v637, 2147483648
  %v639 = vmul.f32 %v638, 1.442695
  %v640 = vpow.pop %v639
  %v641 = vadd.f32 %v640, 1.0
  %v642 = vrcp.pop %v641
  %v643 = vmul.f32 1.0, %v642
  %v644 = vadd.f32 %v494, %v565
  %v645 = vxor.u32 %v644, 2147483648
  %v646 = vmul.f32 %v645, 1.442695
  %v647 = vpow.pop %v646
  %v648 = vadd.f32 %v647, 1.0
  %v649 = vrcp.pop %v648
  %v650 = vmul.f32 1.0, %v649
  %v651 = vmul.f32 %v643, %v634
  %v652 = vadd.f32 %v495, %v651
  %v653 = vtanh.pop %v652
  %v654 = vsub.f32 %v480, %v653
  %v655 = vmul.f32 %v650, %v654
  %v656 = vadd.f32 %v653, %v655
  %s657 = scalar_lea.vmem [#allocation2], 4
  %658 = vst [vmem:[%s657] sm:$0x3] %v656
  %s659 = scalar_lea.vmem %s0, 6
  %v660 = vld [vmem:[%s659] sm:$0x3]
  %662 = vset.pattern.permute.xlu0 0
  %663 = vperm.xlu0 %662, %v660
  %v664 = vpop.permute.xlu0 %663
  %v666 = vmul.f32 %v664, %v95
  %v667 = vmul.f32 %v664, %v99
  %v668 = vmul.f32 %v664, %v103
  %v669 = vadd.f32 %v666, %v114
  %v670 = vadd.f32 %v667, %v118
  %v671 = vadd.f32 %v668, %v122
  %672 = vmatprep.subr.mxu0 %v35
  %673 = vmatpush1.msra.mxu0 %v34
  %674 = vmatprep.subr.mxu0 %v38
  %675 = vmatpush1.msra.mxu0 %v37
  %676 = vmatprep.subr.mxu0 %v41
  %677 = vmatpush1.msra.mxu0 %v40
  %678 = vmatprep.subr.mxu0 %v44
  %679 = vmatpush1.msra.mxu0 %v43
  %680 = vmatprep.subr.mxu0 %v47
  %681 = vmatpush1.msra.mxu0 %v46
  %682 = vmatprep.subr.mxu0 %v50
  %683 = vmatpush1.msra.mxu0 %v49
  %684 = vmatprep.subr.mxu0 %v53
  %685 = vmatpush1.msra.mxu0 %v52
  %686 = vmatprep.subr.mxu0 %v56
  %687 = vmatpush1.msra.mxu0 %v55
  %688 = vmatprep.subr.mxu0 %v59
  %689 = vmatpush1.msra.mxu0 %v58
  %690 = vmatprep.subr.mxu0 %v62
  %691 = vmatpush1.msra.mxu0 %v61
  %692 = vmatprep.subr.mxu0 %v65
  %693 = vmatpush1.msra.mxu0 %v64
  %694 = vmatprep.subr.mxu0 %v68
  %695 = vmatpush1.msra.mxu0 %v67
  %696 = vmatprep.subr.mxu0 %v71
  %697 = vmatpush1.msra.mxu0 %v70
  %698 = vmatprep.subr.mxu0 %v74
  %699 = vmatpush1.msra.mxu0 %v73
  %700 = vmatprep.subr.mxu0 %v77
  %701 = vmatpush1.msra.mxu0 %v76
  %702 = vmatprep.subr.mxu0 %v80
  %703 = vmatpush1.msra.mxu0 %v79
  %704 = vmatprep.subr.mxu0 0.0
  %705 = vmatpush1.msra.mxu0 0.0
  %706 = vmatprep.subr.mxu0 0.0
  %707 = vmatpush1.msra.mxu0 0.0
  %708 = vmatprep.subr.mxu0 0.0
  %709 = vmatpush1.msra.mxu0 0.0
  %710 = vmatprep.subr.mxu0 0.0
  %711 = vmatpush1.msra.mxu0 0.0
  %712 = vmatprep.subr.mxu0 0.0
  %713 = vmatpush1.msra.mxu0 0.0
  %714 = vmatprep.subr.mxu0 0.0
  %715 = vmatpush1.msra.mxu0 0.0
  %716 = vmatprep.subr.mxu0 0.0
  %717 = vmatpush1.msra.mxu0 0.0
  %718 = vmatprep.subr.mxu0 0.0
  %719 = vmatpush1.msra.mxu0 0.0
  %720 = vmatprep.subr.mxu0 0.0
  %721 = vmatpush1.msra.mxu0 0.0
  %722 = vmatprep.subr.mxu0 0.0
  %723 = vmatpush1.msra.mxu0 0.0
  %724 = vmatprep.subr.mxu0 0.0
  %725 = vmatpush1.msra.mxu0 0.0
  %726 = vmatprep.subr.mxu0 0.0
  %727 = vmatpush1.msra.mxu0 0.0
  %728 = vmatprep.subr.mxu0 0.0
  %729 = vmatpush1.msra.mxu0 0.0
  %730 = vmatprep.subr.mxu0 0.0
  %731 = vmatpush1.msra.mxu0 0.0
  %732 = vmatprep.subr.mxu0 0.0
  %733 = vmatpush1.msra.mxu0 0.0
  %734 = vmatprep.subr.mxu0 0.0
  %735 = vmatpush1.msra.mxu0 0.0
  %736 = vmatprep.mubr.f32.mxu0 0.0
  %737 = vmatmul.mubr.f32.gmra.mrb[0].mxu0 %v656
  %v738 = vpop.f32.mrb[0].mxu0
  %v739 = vadd.f32 %v133, %v738
  %v740 = vpop.f32.mrb[0].mxu0
  %v741 = vadd.f32 %v137, %v740
  %742 = vdwg.mxu0
  %743 = vmatprep.subr.mxu0 0.0
  %744 = vmatpush1.msra.mxu0 %v36
  %745 = vmatprep.subr.mxu0 0.0
  %746 = vmatpush1.msra.mxu0 %v39
  %747 = vmatprep.subr.mxu0 0.0
  %748 = vmatpush1.msra.mxu0 %v42
  %749 = vmatprep.subr.mxu0 0.0
  %750 = vmatpush1.msra.mxu0 %v45
  %751 = vmatprep.subr.mxu0 0.0
  %752 = vmatpush1.msra.mxu0 %v48
  %753 = vmatprep.subr.mxu0 0.0
  %754 = vmatpush1.msra.mxu0 %v51
  %755 = vmatprep.subr.mxu0 0.0
  %756 = vmatpush1.msra.mxu0 %v54
  %757 = vmatprep.subr.mxu0 0.0
  %758 = vmatpush1.msra.mxu0 %v57
  %759 = vmatprep.subr.mxu0 0.0
  %760 = vmatpush1.msra.mxu0 %v60
  %761 = vmatprep.subr.mxu0 0.0
  %762 = vmatpush1.msra.mxu0 %v63
  %763 = vmatprep.subr.mxu0 0.0
  %764 = vmatpush1.msra.mxu0 %v66
  %765 = vmatprep.subr.mxu0 0.0
  %766 = vmatpush1.msra.mxu0 %v69
  %767 = vmatprep.subr.mxu0 0.0
  %768 = vmatpush1.msra.mxu0 %v72
  %769 = vmatprep.subr.mxu0 0.0
  %770 = vmatpush1.msra.mxu0 %v75
  %771 = vmatprep.subr.mxu0 0.0
  %772 = vmatpush1.msra.mxu0 %v78
  %773 = vmatprep.subr.mxu0 0.0
  %774 = vmatpush1.msra.mxu0 %v81
  %775 = vmatprep.subr.mxu0 0.0
  %776 = vmatpush1.msra.mxu0 0.0
  %777 = vmatprep.subr.mxu0 0.0
  %778 = vmatpush1.msra.mxu0 0.0
  %779 = vmatprep.subr.mxu0 0.0
  %780 = vmatpush1.msra.mxu0 0.0
  %781 = vmatprep.subr.mxu0 0.0
  %782 = vmatpush1.msra.mxu0 0.0
  %783 = vmatprep.subr.mxu0 0.0
  %784 = vmatpush1.msra.mxu0 0.0
  %785 = vmatprep.subr.mxu0 0.0
  %786 = vmatpush1.msra.mxu0 0.0
  %787 = vmatprep.subr.mxu0 0.0
  %788 = vmatpush1.msra.mxu0 0.0
  %789 = vmatprep.subr.mxu0 0.0
  %790 = vmatpush1.msra.mxu0 0.0
  %791 = vmatprep.subr.mxu0 0.0
  %792 = vmatpush1.msra.mxu0 0.0
  %793 = vmatprep.subr.mxu0 0.0
  %794 = vmatpush1.msra.mxu0 0.0
  %795 = vmatprep.subr.mxu0 0.0
  %796 = vmatpush1.msra.mxu0 0.0
  %797 = vmatprep.subr.mxu0 0.0
  %798 = vmatpush1.msra.mxu0 0.0
  %799 = vmatprep.subr.mxu0 0.0
  %800 = vmatpush1.msra.mxu0 0.0
  %801 = vmatprep.subr.mxu0 0.0
  %802 = vmatpush1.msra.mxu0 0.0
  %803 = vmatprep.subr.mxu0 0.0
  %804 = vmatpush1.msra.mxu0 0.0
  %805 = vmatprep.subr.mxu0 0.0
  %806 = vmatpush1.msra.mxu0 0.0
  %807 = vmatprep.mubr.f32.mxu0 0.0
  %808 = vmatmul.mubr.f32.gmra.mrb[0].mxu0 %v656
  %v809 = vpop.f32.mrb[0].mxu0
  %v810 = vadd.f32 %v141, %v809
  %v811 = vpop.f32.mrb[0].mxu0
  %812 = vdwg.mxu0
  %v813 = vadd.f32 %v669, %v739
  %v814 = vxor.u32 %v813, 2147483648
  %v815 = vmul.f32 %v814, 1.442695
  %v816 = vpow.pop %v815
  %v817 = vadd.f32 %v816, 1.0
  %v818 = vrcp.pop %v817
  %v819 = vmul.f32 1.0, %v818
  %v820 = vadd.f32 %v670, %v741
  %v821 = vxor.u32 %v820, 2147483648
  %v822 = vmul.f32 %v821, 1.442695
  %v823 = vpow.pop %v822
  %v824 = vadd.f32 %v823, 1.0
  %v825 = vrcp.pop %v824
  %v826 = vmul.f32 1.0, %v825
  %v827 = vmul.f32 %v819, %v810
  %v828 = vadd.f32 %v671, %v827
  %v829 = vtanh.pop %v828
  %v830 = vsub.f32 %v656, %v829
  %v831 = vmul.f32 %v826, %v830
  %v832 = vadd.f32 %v829, %v831
  %s833 = scalar_lea.vmem [#allocation2], 6
  %834 = vst [vmem:[%s833] sm:$0x3] %v832
  %s835 = scalar_lea.vmem %s0, 8
  %v836 = vld [vmem:[%s835] sm:$0x3]
  %838 = vset.pattern.permute.xlu0 0
  %839 = vperm.xlu0 %838, %v836
  %v840 = vpop.permute.xlu0 %839
  %v842 = vmul.f32 %v840, %v95
  %v843 = vmul.f32 %v840, %v99
  %v844 = vmul.f32 %v840, %v103
  %v845 = vadd.f32 %v842, %v114
  %v846 = vadd.f32 %v843, %v118
  %v847 = vadd.f32 %v844, %v122
  %848 = vmatprep.subr.mxu0 %v35
  %849 = vmatpush1.msra.mxu0 %v34
  %850 = vmatprep.subr.mxu0 %v38
  %851 = vmatpush1.msra.mxu0 %v37
  %852 = vmatprep.subr.mxu0 %v41
  %853 = vmatpush1.msra.mxu0 %v40
  %854 = vmatprep.subr.mxu0 %v44
  %855 = vmatpush1.msra.mxu0 %v43
  %856 = vmatprep.subr.mxu0 %v47
  %857 = vmatpush1.msra.mxu0 %v46
  %858 = vmatprep.subr.mxu0 %v50
  %859 = vmatpush1.msra.mxu0 %v49
  %860 = vmatprep.subr.mxu0 %v53
  %861 = vmatpush1.msra.mxu0 %v52
  %862 = vmatprep.subr.mxu0 %v56
  %863 = vmatpush1.msra.mxu0 %v55
  %864 = vmatprep.subr.mxu0 %v59
  %865 = vmatpush1.msra.mxu0 %v58
  %866 = vmatprep.subr.mxu0 %v62
  %867 = vmatpush1.msra.mxu0 %v61
  %868 = vmatprep.subr.mxu0 %v65
  %869 = vmatpush1.msra.mxu0 %v64
  %870 = vmatprep.subr.mxu0 %v68
  %871 = vmatpush1.msra.mxu0 %v67
  %872 = vmatprep.subr.mxu0 %v71
  %873 = vmatpush1.msra.mxu0 %v70
  %874 = vmatprep.subr.mxu0 %v74
  %875 = vmatpush1.msra.mxu0 %v73
  %876 = vmatprep.subr.mxu0 %v77
  %877 = vmatpush1.msra.mxu0 %v76
  %878 = vmatprep.subr.mxu0 %v80
  %879 = vmatpush1.msra.mxu0 %v79
  %880 = vmatprep.subr.mxu0 0.0
  %881 = vmatpush1.msra.mxu0 0.0
  %882 = vmatprep.subr.mxu0 0.0
  %883 = vmatpush1.msra.mxu0 0.0
  %884 = vmatprep.subr.mxu0 0.0
  %885 = vmatpush1.msra.mxu0 0.0
  %886 = vmatprep.subr.mxu0 0.0
  %887 = vmatpush1.msra.mxu0 0.0
  %888 = vmatprep.subr.mxu0 0.0
  %889 = vmatpush1.msra.mxu0 0.0
  %890 = vmatprep.subr.mxu0 0.0
  %891 = vmatpush1.msra.mxu0 0.0
  %892 = vmatprep.subr.mxu0 0.0
  %893 = vmatpush1.msra.mxu0 0.0
  %894 = vmatprep.subr.mxu0 0.0
  %895 = vmatpush1.msra.mxu0 0.0
  %896 = vmatprep.subr.mxu0 0.0
  %897 = vmatpush1.msra.mxu0 0.0
  %898 = vmatprep.subr.mxu0 0.0
  %899 = vmatpush1.msra.mxu0 0.0
  %900 = vmatprep.subr.mxu0 0.0
  %901 = vmatpush1.msra.mxu0 0.0
  %902 = vmatprep.subr.mxu0 0.0
  %903 = vmatpush1.msra.mxu0 0.0
  %904 = vmatprep.subr.mxu0 0.0
  %905 = vmatpush1.msra.mxu0 0.0
  %906 = vmatprep.subr.mxu0 0.0
  %907 = vmatpush1.msra.mxu0 0.0
  %908 = vmatprep.subr.mxu0 0.0
  %909 = vmatpush1.msra.mxu0 0.0
  %910 = vmatprep.subr.mxu0 0.0
  %911 = vmatpush1.msra.mxu0 0.0
  %912 = vmatprep.mubr.f32.mxu0 0.0
  %913 = vmatmul.mubr.f32.gmra.mrb[0].mxu0 %v832
  %v914 = vpop.f32.mrb[0].mxu0
  %v915 = vadd.f32 %v133, %v914
  %v916 = vpop.f32.mrb[0].mxu0
  %v917 = vadd.f32 %v137, %v916
  %918 = vdwg.mxu0
  %919 = vmatprep.subr.mxu0 0.0
  %920 = vmatpush1.msra.mxu0 %v36
  %921 = vmatprep.subr.mxu0 0.0
  %922 = vmatpush1.msra.mxu0 %v39
  %923 = vmatprep.subr.mxu0 0.0
  %924 = vmatpush1.msra.mxu0 %v42
  %925 = vmatprep.subr.mxu0 0.0
  %926 = vmatpush1.msra.mxu0 %v45
  %927 = vmatprep.subr.mxu0 0.0
  %928 = vmatpush1.msra.mxu0 %v48
  %929 = vmatprep.subr.mxu0 0.0
  %930 = vmatpush1.msra.mxu0 %v51
  %931 = vmatprep.subr.mxu0 0.0
  %932 = vmatpush1.msra.mxu0 %v54
  %933 = vmatprep.subr.mxu0 0.0
  %934 = vmatpush1.msra.mxu0 %v57
  %935 = vmatprep.subr.mxu0 0.0
  %936 = vmatpush1.msra.mxu0 %v60
  %937 = vmatprep.subr.mxu0 0.0
  %938 = vmatpush1.msra.mxu0 %v63
  %939 = vmatprep.subr.mxu0 0.0
  %940 = vmatpush1.msra.mxu0 %v66
  %941 = vmatprep.subr.mxu0 0.0
  %942 = vmatpush1.msra.mxu0 %v69
  %943 = vmatprep.subr.mxu0 0.0
  %944 = vmatpush1.msra.mxu0 %v72
  %945 = vmatprep.subr.mxu0 0.0
  %946 = vmatpush1.msra.mxu0 %v75
  %947 = vmatprep.subr.mxu0 0.0
  %948 = vmatpush1.msra.mxu0 %v78
  %949 = vmatprep.subr.mxu0 0.0
  %950 = vmatpush1.msra.mxu0 %v81
  %951 = vmatprep.subr.mxu0 0.0
  %952 = vmatpush1.msra.mxu0 0.0
  %953 = vmatprep.subr.mxu0 0.0
  %954 = vmatpush1.msra.mxu0 0.0
  %955 = vmatprep.subr.mxu0 0.0
  %956 = vmatpush1.msra.mxu0 0.0
  %957 = vmatprep.subr.mxu0 0.0
  %958 = vmatpush1.msra.mxu0 0.0
  %959 = vmatprep.subr.mxu0 0.0
  %960 = vmatpush1.msra.mxu0 0.0
  %961 = vmatprep.subr.mxu0 0.0
  %962 = vmatpush1.msra.mxu0 0.0
  %963 = vmatprep.subr.mxu0 0.0
  %964 = vmatpush1.msra.mxu0 0.0
  %965 = vmatprep.subr.mxu0 0.0
  %966 = vmatpush1.msra.mxu0 0.0
  %967 = vmatprep.subr.mxu0 0.0
  %968 = vmatpush1.msra.mxu0 0.0
  %969 = vmatprep.subr.mxu0 0.0
  %970 = vmatpush1.msra.mxu0 0.0
  %971 = vmatprep.subr.mxu0 0.0
  %972 = vmatpush1.msra.mxu0 0.0
  %973 = vmatprep.subr.mxu0 0.0
  %974 = vmatpush1.msra.mxu0 0.0
  %975 = vmatprep.subr.mxu0 0.0
  %976 = vmatpush1.msra.mxu0 0.0
  %977 = vmatprep.subr.mxu0 0.0
  %978 = vmatpush1.msra.mxu0 0.0
  %979 = vmatprep.subr.mxu0 0.0
  %980 = vmatpush1.msra.mxu0 0.0
  %981 = vmatprep.subr.mxu0 0.0
  %982 = vmatpush1.msra.mxu0 0.0
  %983 = vmatprep.mubr.f32.mxu0 0.0
  %984 = vmatmul.mubr.f32.gmra.mrb[0].mxu0 %v832
  %v985 = vpop.f32.mrb[0].mxu0
  %v986 = vadd.f32 %v141, %v985
  %v987 = vpop.f32.mrb[0].mxu0
  %988 = vdwg.mxu0
  %v989 = vadd.f32 %v845, %v915
  %v990 = vxor.u32 %v989, 2147483648
  %v991 = vmul.f32 %v990, 1.442695
  %v992 = vpow.pop %v991
  %v993 = vadd.f32 %v992, 1.0
  %v994 = vrcp.pop %v993
  %v995 = vmul.f32 1.0, %v994
  %v996 = vadd.f32 %v846, %v917
  %v997 = vxor.u32 %v996, 2147483648
  %v998 = vmul.f32 %v997, 1.442695
  %v999 = vpow.pop %v998
  %v1000 = vadd.f32 %v999, 1.0
  %v1001 = vrcp.pop %v1000
  %v1002 = vmul.f32 1.0, %v1001
  %v1003 = vmul.f32 %v995, %v986
  %v1004 = vadd.f32 %v847, %v1003
  %v1005 = vtanh.pop %v1004
  %v1006 = vsub.f32 %v832, %v1005
  %v1007 = vmul.f32 %v1002, %v1006
  %v1008 = vadd.f32 %v1005, %v1007
  %s1009 = scalar_lea.vmem [#allocation2], 8
  %1010 = vst [vmem:[%s1009] sm:$0x3] %v1008
  %s1011 = scalar_lea.vmem %s0, 10
  %v1012 = vld [vmem:[%s1011] sm:$0x3]
  %1014 = vset.pattern.permute.xlu0 0
  %1015 = vperm.xlu0 %1014, %v1012
  %v1016 = vpop.permute.xlu0 %1015
  %v1018 = vmul.f32 %v1016, %v95
  %v1019 = vmul.f32 %v1016, %v99
  %v1020 = vmul.f32 %v1016, %v103
  %v1021 = vadd.f32 %v1018, %v114
  %v1022 = vadd.f32 %v1019, %v118
  %v1023 = vadd.f32 %v1020, %v122
  %1024 = vmatprep.subr.mxu0 %v35
  %1025 = vmatpush1.msra.mxu0 %v34
  %1026 = vmatprep.subr.mxu0 %v38
  %1027 = vmatpush1.msra.mxu0 %v37
  %1028 = vmatprep.subr.mxu0 %v41
  %1029 = vmatpush1.msra.mxu0 %v40
  %1030 = vmatprep.subr.mxu0 %v44
  %1031 = vmatpush1.msra.mxu0 %v43
  %1032 = vmatprep.subr.mxu0 %v47
  %1033 = vmatpush1.msra.mxu0 %v46
  %1034 = vmatprep.subr.mxu0 %v50
  %1035 = vmatpush1.msra.mxu0 %v49
  %1036 = vmatprep.subr.mxu0 %v53
  %1037 = vmatpush1.msra.mxu0 %v52
  %1038 = vmatprep.subr.mxu0 %v56
  %1039 = vmatpush1.msra.mxu0 %v55
  %1040 = vmatprep.subr.mxu0 %v59
  %1041 = vmatpush1.msra.mxu0 %v58
  %1042 = vmatprep.subr.mxu0 %v62
  %1043 = vmatpush1.msra.mxu0 %v61
  %1044 = vmatprep.subr.mxu0 %v65
  %1045 = vmatpush1.msra.mxu0 %v64
  %1046 = vmatprep.subr.mxu0 %v68
  %1047 = vmatpush1.msra.mxu0 %v67
  %1048 = vmatprep.subr.mxu0 %v71
  %1049 = vmatpush1.msra.mxu0 %v70
  %1050 = vmatprep.subr.mxu0 %v74
  %1051 = vmatpush1.msra.mxu0 %v73
  %1052 = vmatprep.subr.mxu0 %v77
  %1053 = vmatpush1.msra.mxu0 %v76
  %1054 = vmatprep.subr.mxu0 %v80
  %1055 = vmatpush1.msra.mxu0 %v79
  %1056 = vmatprep.subr.mxu0 0.0
  %1057 = vmatpush1.msra.mxu0 0.0
  %1058 = vmatprep.subr.mxu0 0.0
  %1059 = vmatpush1.msra.mxu0 0.0
  %1060 = vmatprep.subr.mxu0 0.0
  %1061 = vmatpush1.msra.mxu0 0.0
  %1062 = vmatprep.subr.mxu0 0.0
  %1063 = vmatpush1.msra.mxu0 0.0
  %1064 = vmatprep.subr.mxu0 0.0
  %1065 = vmatpush1.msra.mxu0 0.0
  %1066 = vmatprep.subr.mxu0 0.0
  %1067 = vmatpush1.msra.mxu0 0.0
  %1068 = vmatprep.subr.mxu0 0.0
  %1069 = vmatpush1.msra.mxu0 0.0
  %1070 = vmatprep.subr.mxu0 0.0
  %1071 = vmatpush1.msra.mxu0 0.0
  %1072 = vmatprep.subr.mxu0 0.0
  %1073 = vmatpush1.msra.mxu0 0.0
  %1074 = vmatprep.subr.mxu0 0.0
  %1075 = vmatpush1.msra.mxu0 0.0
  %1076 = vmatprep.subr.mxu0 0.0
  %1077 = vmatpush1.msra.mxu0 0.0
  %1078 = vmatprep.subr.mxu0 0.0
  %1079 = vmatpush1.msra.mxu0 0.0
  %1080 = vmatprep.subr.mxu0 0.0
  %1081 = vmatpush1.msra.mxu0 0.0
  %1082 = vmatprep.subr.mxu0 0.0
  %1083 = vmatpush1.msra.mxu0 0.0
  %1084 = vmatprep.subr.mxu0 0.0
  %1085 = vmatpush1.msra.mxu0 0.0
  %1086 = vmatprep.subr.mxu0 0.0
  %1087 = vmatpush1.msra.mxu0 0.0
  %1088 = vmatprep.mubr.f32.mxu0 0.0
  %1089 = vmatmul.mubr.f32.gmra.mrb[0].mxu0 %v1008
  %v1090 = vpop.f32.mrb[0].mxu0
  %v1091 = vadd.f32 %v133, %v1090
  %v1092 = vpop.f32.mrb[0].mxu0
  %v1093 = vadd.f32 %v137, %v1092
  %1094 = vdwg.mxu0
  %1095 = vmatprep.subr.mxu0 0.0
  %1096 = vmatpush1.msra.mxu0 %v36
  %1097 = vmatprep.subr.mxu0 0.0
  %1098 = vmatpush1.msra.mxu0 %v39
  %1099 = vmatprep.subr.mxu0 0.0
  %1100 = vmatpush1.msra.mxu0 %v42
  %1101 = vmatprep.subr.mxu0 0.0
  %1102 = vmatpush1.msra.mxu0 %v45
  %1103 = vmatprep.subr.mxu0 0.0
  %1104 = vmatpush1.msra.mxu0 %v48
  %1105 = vmatprep.subr.mxu0 0.0
  %1106 = vmatpush1.msra.mxu0 %v51
  %1107 = vmatprep.subr.mxu0 0.0
  %1108 = vmatpush1.msra.mxu0 %v54
  %1109 = vmatprep.subr.mxu0 0.0
  %1110 = vmatpush1.msra.mxu0 %v57
  %1111 = vmatprep.subr.mxu0 0.0
  %1112 = vmatpush1.msra.mxu0 %v60
  %1113 = vmatprep.subr.mxu0 0.0
  %1114 = vmatpush1.msra.mxu0 %v63
  %1115 = vmatprep.subr.mxu0 0.0
  %1116 = vmatpush1.msra.mxu0 %v66
  %1117 = vmatprep.subr.mxu0 0.0
  %1118 = vmatpush1.msra.mxu0 %v69
  %1119 = vmatprep.subr.mxu0 0.0
  %1120 = vmatpush1.msra.mxu0 %v72
  %1121 = vmatprep.subr.mxu0 0.0
  %1122 = vmatpush1.msra.mxu0 %v75
  %1123 = vmatprep.subr.mxu0 0.0
  %1124 = vmatpush1.msra.mxu0 %v78
  %1125 = vmatprep.subr.mxu0 0.0
  %1126 = vmatpush1.msra.mxu0 %v81
  %1127 = vmatprep.subr.mxu0 0.0
  %1128 = vmatpush1.msra.mxu0 0.0
  %1129 = vmatprep.subr.mxu0 0.0
  %1130 = vmatpush1.msra.mxu0 0.0
  %1131 = vmatprep.subr.mxu0 0.0
  %1132 = vmatpush1.msra.mxu0 0.0
  %1133 = vmatprep.subr.mxu0 0.0
  %1134 = vmatpush1.msra.mxu0 0.0
  %1135 = vmatprep.subr.mxu0 0.0
  %1136 = vmatpush1.msra.mxu0 0.0
  %1137 = vmatprep.subr.mxu0 0.0
  %1138 = vmatpush1.msra.mxu0 0.0
  %1139 = vmatprep.subr.mxu0 0.0
  %1140 = vmatpush1.msra.mxu0 0.0
  %1141 = vmatprep.subr.mxu0 0.0
  %1142 = vmatpush1.msra.mxu0 0.0
  %1143 = vmatprep.subr.mxu0 0.0
  %1144 = vmatpush1.msra.mxu0 0.0
  %1145 = vmatprep.subr.mxu0 0.0
  %1146 = vmatpush1.msra.mxu0 0.0
  %1147 = vmatprep.subr.mxu0 0.0
  %1148 = vmatpush1.msra.mxu0 0.0
  %1149 = vmatprep.subr.mxu0 0.0
  %1150 = vmatpush1.msra.mxu0 0.0
  %1151 = vmatprep.subr.mxu0 0.0
  %1152 = vmatpush1.msra.mxu0 0.0
  %1153 = vmatprep.subr.mxu0 0.0
  %1154 = vmatpush1.msra.mxu0 0.0
  %1155 = vmatprep.subr.mxu0 0.0
  %1156 = vmatpush1.msra.mxu0 0.0
  %1157 = vmatprep.subr.mxu0 0.0
  %1158 = vmatpush1.msra.mxu0 0.0
  %1159 = vmatprep.mubr.f32.mxu0 0.0
  %1160 = vmatmul.mubr.f32.gmra.mrb[0].mxu0 %v1008
  %v1161 = vpop.f32.mrb[0].mxu0
  %v1162 = vadd.f32 %v141, %v1161
  %v1163 = vpop.f32.mrb[0].mxu0
  %1164 = vdwg.mxu0
  %v1165 = vadd.f32 %v1021, %v1091
  %v1166 = vxor.u32 %v1165, 2147483648
  %v1167 = vmul.f32 %v1166, 1.442695
  %v1168 = vpow.pop %v1167
  %v1169 = vadd.f32 %v1168, 1.0
  %v1170 = vrcp.pop %v1169
  %v1171 = vmul.f32 1.0, %v1170
  %v1172 = vadd.f32 %v1022, %v1093
  %v1173 = vxor.u32 %v1172, 2147483648
  %v1174 = vmul.f32 %v1173, 1.442695
  %v1175 = vpow.pop %v1174
  %v1176 = vadd.f32 %v1175, 1.0
  %v1177 = vrcp.pop %v1176
  %v1178 = vmul.f32 1.0, %v1177
  %v1179 = vmul.f32 %v1171, %v1162
  %v1180 = vadd.f32 %v1023, %v1179
  %v1181 = vtanh.pop %v1180
  %v1182 = vsub.f32 %v1008, %v1181
  %v1183 = vmul.f32 %v1178, %v1182
  %v1184 = vadd.f32 %v1181, %v1183
  %s1185 = scalar_lea.vmem [#allocation2], 10
  %1186 = vst [vmem:[%s1185] sm:$0x3] %v1184
  %s1187 = scalar_lea.vmem %s0, 12
  %v1188 = vld [vmem:[%s1187] sm:$0x3]
  %1190 = vset.pattern.permute.xlu0 0
  %1191 = vperm.xlu0 %1190, %v1188
  %v1192 = vpop.permute.xlu0 %1191
  %v1194 = vmul.f32 %v1192, %v95
  %v1195 = vmul.f32 %v1192, %v99
  %v1196 = vmul.f32 %v1192, %v103
  %v1197 = vadd.f32 %v1194, %v114
  %v1198 = vadd.f32 %v1195, %v118
  %v1199 = vadd.f32 %v1196, %v122
  %1200 = vmatprep.subr.mxu0 %v35
  %1201 = vmatpush1.msra.mxu0 %v34
  %1202 = vmatprep.subr.mxu0 %v38
  %1203 = vmatpush1.msra.mxu0 %v37
  %1204 = vmatprep.subr.mxu0 %v41
  %1205 = vmatpush1.msra.mxu0 %v40
  %1206 = vmatprep.subr.mxu0 %v44
  %1207 = vmatpush1.msra.mxu0 %v43
  %1208 = vmatprep.subr.mxu0 %v47
  %1209 = vmatpush1.msra.mxu0 %v46
  %1210 = vmatprep.subr.mxu0 %v50
  %1211 = vmatpush1.msra.mxu0 %v49
  %1212 = vmatprep.subr.mxu0 %v53
  %1213 = vmatpush1.msra.mxu0 %v52
  %1214 = vmatprep.subr.mxu0 %v56
  %1215 = vmatpush1.msra.mxu0 %v55
  %1216 = vmatprep.subr.mxu0 %v59
  %1217 = vmatpush1.msra.mxu0 %v58
  %1218 = vmatprep.subr.mxu0 %v62
  %1219 = vmatpush1.msra.mxu0 %v61
  %1220 = vmatprep.subr.mxu0 %v65
  %1221 = vmatpush1.msra.mxu0 %v64
  %1222 = vmatprep.subr.mxu0 %v68
  %1223 = vmatpush1.msra.mxu0 %v67
  %1224 = vmatprep.subr.mxu0 %v71
  %1225 = vmatpush1.msra.mxu0 %v70
  %1226 = vmatprep.subr.mxu0 %v74
  %1227 = vmatpush1.msra.mxu0 %v73
  %1228 = vmatprep.subr.mxu0 %v77
  %1229 = vmatpush1.msra.mxu0 %v76
  %1230 = vmatprep.subr.mxu0 %v80
  %1231 = vmatpush1.msra.mxu0 %v79
  %1232 = vmatprep.subr.mxu0 0.0
  %1233 = vmatpush1.msra.mxu0 0.0
  %1234 = vmatprep.subr.mxu0 0.0
  %1235 = vmatpush1.msra.mxu0 0.0
  %1236 = vmatprep.subr.mxu0 0.0
  %1237 = vmatpush1.msra.mxu0 0.0
  %1238 = vmatprep.subr.mxu0 0.0
  %1239 = vmatpush1.msra.mxu0 0.0
  %1240 = vmatprep.subr.mxu0 0.0
  %1241 = vmatpush1.msra.mxu0 0.0
  %1242 = vmatprep.subr.mxu0 0.0
  %1243 = vmatpush1.msra.mxu0 0.0
  %1244 = vmatprep.subr.mxu0 0.0
  %1245 = vmatpush1.msra.mxu0 0.0
  %1246 = vmatprep.subr.mxu0 0.0
  %1247 = vmatpush1.msra.mxu0 0.0
  %1248 = vmatprep.subr.mxu0 0.0
  %1249 = vmatpush1.msra.mxu0 0.0
  %1250 = vmatprep.subr.mxu0 0.0
  %1251 = vmatpush1.msra.mxu0 0.0
  %1252 = vmatprep.subr.mxu0 0.0
  %1253 = vmatpush1.msra.mxu0 0.0
  %1254 = vmatprep.subr.mxu0 0.0
  %1255 = vmatpush1.msra.mxu0 0.0
  %1256 = vmatprep.subr.mxu0 0.0
  %1257 = vmatpush1.msra.mxu0 0.0
  %1258 = vmatprep.subr.mxu0 0.0
  %1259 = vmatpush1.msra.mxu0 0.0
  %1260 = vmatprep.subr.mxu0 0.0
  %1261 = vmatpush1.msra.mxu0 0.0
  %1262 = vmatprep.subr.mxu0 0.0
  %1263 = vmatpush1.msra.mxu0 0.0
  %1264 = vmatprep.mubr.f32.mxu0 0.0
  %1265 = vmatmul.mubr.f32.gmra.mrb[0].mxu0 %v1184
  %v1266 = vpop.f32.mrb[0].mxu0
  %v1267 = vadd.f32 %v133, %v1266
  %v1268 = vpop.f32.mrb[0].mxu0
  %v1269 = vadd.f32 %v137, %v1268
  %1270 = vdwg.mxu0
  %1271 = vmatprep.subr.mxu0 0.0
  %1272 = vmatpush1.msra.mxu0 %v36
  %1273 = vmatprep.subr.mxu0 0.0
  %1274 = vmatpush1.msra.mxu0 %v39
  %1275 = vmatprep.subr.mxu0 0.0
  %1276 = vmatpush1.msra.mxu0 %v42
  %1277 = vmatprep.subr.mxu0 0.0
  %1278 = vmatpush1.msra.mxu0 %v45
  %1279 = vmatprep.subr.mxu0 0.0
  %1280 = vmatpush1.msra.mxu0 %v48
  %1281 = vmatprep.subr.mxu0 0.0
  %1282 = vmatpush1.msra.mxu0 %v51
  %1283 = vmatprep.subr.mxu0 0.0
  %1284 = vmatpush1.msra.mxu0 %v54
  %1285 = vmatprep.subr.mxu0 0.0
  %1286 = vmatpush1.msra.mxu0 %v57
  %1287 = vmatprep.subr.mxu0 0.0
  %1288 = vmatpush1.msra.mxu0 %v60
  %1289 = vmatprep.subr.mxu0 0.0
  %1290 = vmatpush1.msra.mxu0 %v63
  %1291 = vmatprep.subr.mxu0 0.0
  %1292 = vmatpush1.msra.mxu0 %v66
  %1293 = vmatprep.subr.mxu0 0.0
  %1294 = vmatpush1.msra.mxu0 %v69
  %1295 = vmatprep.subr.mxu0 0.0
  %1296 = vmatpush1.msra.mxu0 %v72
  %1297 = vmatprep.subr.mxu0 0.0
  %1298 = vmatpush1.msra.mxu0 %v75
  %1299 = vmatprep.subr.mxu0 0.0
  %1300 = vmatpush1.msra.mxu0 %v78
  %1301 = vmatprep.subr.mxu0 0.0
  %1302 = vmatpush1.msra.mxu0 %v81
  %1303 = vmatprep.subr.mxu0 0.0
  %1304 = vmatpush1.msra.mxu0 0.0
  %1305 = vmatprep.subr.mxu0 0.0
  %1306 = vmatpush1.msra.mxu0 0.0
  %1307 = vmatprep.subr.mxu0 0.0
  %1308 = vmatpush1.msra.mxu0 0.0
  %1309 = vmatprep.subr.mxu0 0.0
  %1310 = vmatpush1.msra.mxu0 0.0
  %1311 = vmatprep.subr.mxu0 0.0
  %1312 = vmatpush1.msra.mxu0 0.0
  %1313 = vmatprep.subr.mxu0 0.0
  %1314 = vmatpush1.msra.mxu0 0.0
  %1315 = vmatprep.subr.mxu0 0.0
  %1316 = vmatpush1.msra.mxu0 0.0
  %1317 = vmatprep.subr.mxu0 0.0
  %1318 = vmatpush1.msra.mxu0 0.0
  %1319 = vmatprep.subr.mxu0 0.0
  %1320 = vmatpush1.msra.mxu0 0.0
  %1321 = vmatprep.subr.mxu0 0.0
  %1322 = vmatpush1.msra.mxu0 0.0
  %1323 = vmatprep.subr.mxu0 0.0
  %1324 = vmatpush1.msra.mxu0 0.0
  %1325 = vmatprep.subr.mxu0 0.0
  %1326 = vmatpush1.msra.mxu0 0.0
  %1327 = vmatprep.subr.mxu0 0.0
  %1328 = vmatpush1.msra.mxu0 0.0
  %1329 = vmatprep.subr.mxu0 0.0
  %1330 = vmatpush1.msra.mxu0 0.0
  %1331 = vmatprep.subr.mxu0 0.0
  %1332 = vmatpush1.msra.mxu0 0.0
  %1333 = vmatprep.subr.mxu0 0.0
  %1334 = vmatpush1.msra.mxu0 0.0
  %1335 = vmatprep.mubr.f32.mxu0 0.0
  %1336 = vmatmul.mubr.f32.gmra.mrb[0].mxu0 %v1184
  %v1337 = vpop.f32.mrb[0].mxu0
  %v1338 = vadd.f32 %v141, %v1337
  %v1339 = vpop.f32.mrb[0].mxu0
  %1340 = vdwg.mxu0
  %v1341 = vadd.f32 %v1197, %v1267
  %v1342 = vxor.u32 %v1341, 2147483648
  %v1343 = vmul.f32 %v1342, 1.442695
  %v1344 = vpow.pop %v1343
  %v1345 = vadd.f32 %v1344, 1.0
  %v1346 = vrcp.pop %v1345
  %v1347 = vmul.f32 1.0, %v1346
  %v1348 = vadd.f32 %v1198, %v1269
  %v1349 = vxor.u32 %v1348, 2147483648
  %v1350 = vmul.f32 %v1349, 1.442695
  %v1351 = vpow.pop %v1350
  %v1352 = vadd.f32 %v1351, 1.0
  %v1353 = vrcp.pop %v1352
  %v1354 = vmul.f32 1.0, %v1353
  %v1355 = vmul.f32 %v1347, %v1338
  %v1356 = vadd.f32 %v1199, %v1355
  %v1357 = vtanh.pop %v1356
  %v1358 = vsub.f32 %v1184, %v1357
  %v1359 = vmul.f32 %v1354, %v1358
  %v1360 = vadd.f32 %v1357, %v1359
  %s1361 = scalar_lea.vmem [#allocation2], 12
  %1362 = vst [vmem:[%s1361] sm:$0x3] %v1360
  %s1363 = scalar_lea.vmem %s0, 14
  %v1364 = vld [vmem:[%s1363] sm:$0x3]
  %1366 = vset.pattern.permute.xlu0 0
  %1367 = vperm.xlu0 %1366, %v1364
  %v1368 = vpop.permute.xlu0 %1367
  %v1370 = vmul.f32 %v1368, %v95
  %v1371 = vmul.f32 %v1368, %v99
  %v1372 = vmul.f32 %v1368, %v103
  %v1373 = vadd.f32 %v1370, %v114
  %v1374 = vadd.f32 %v1371, %v118
  %v1375 = vadd.f32 %v1372, %v122
  %1376 = vmatprep.subr.mxu0 %v35
  %1377 = vmatpush1.msra.mxu0 %v34
  %1378 = vmatprep.subr.mxu0 %v38
  %1379 = vmatpush1.msra.mxu0 %v37
  %1380 = vmatprep.subr.mxu0 %v41
  %1381 = vmatpush1.msra.mxu0 %v40
  %1382 = vmatprep.subr.mxu0 %v44
  %1383 = vmatpush1.msra.mxu0 %v43
  %1384 = vmatprep.subr.mxu0 %v47
  %1385 = vmatpush1.msra.mxu0 %v46
  %1386 = vmatprep.subr.mxu0 %v50
  %1387 = vmatpush1.msra.mxu0 %v49
  %1388 = vmatprep.subr.mxu0 %v53
  %1389 = vmatpush1.msra.mxu0 %v52
  %1390 = vmatprep.subr.mxu0 %v56
  %1391 = vmatpush1.msra.mxu0 %v55
  %1392 = vmatprep.subr.mxu0 %v59
  %1393 = vmatpush1.msra.mxu0 %v58
  %1394 = vmatprep.subr.mxu0 %v62
  %1395 = vmatpush1.msra.mxu0 %v61
  %1396 = vmatprep.subr.mxu0 %v65
  %1397 = vmatpush1.msra.mxu0 %v64
  %1398 = vmatprep.subr.mxu0 %v68
  %1399 = vmatpush1.msra.mxu0 %v67
  %1400 = vmatprep.subr.mxu0 %v71
  %1401 = vmatpush1.msra.mxu0 %v70
  %1402 = vmatprep.subr.mxu0 %v74
  %1403 = vmatpush1.msra.mxu0 %v73
  %1404 = vmatprep.subr.mxu0 %v77
  %1405 = vmatpush1.msra.mxu0 %v76
  %1406 = vmatprep.subr.mxu0 %v80
  %1407 = vmatpush1.msra.mxu0 %v79
  %1408 = vmatprep.subr.mxu0 0.0
  %1409 = vmatpush1.msra.mxu0 0.0
  %1410 = vmatprep.subr.mxu0 0.0
  %1411 = vmatpush1.msra.mxu0 0.0
  %1412 = vmatprep.subr.mxu0 0.0
  %1413 = vmatpush1.msra.mxu0 0.0
  %1414 = vmatprep.subr.mxu0 0.0
  %1415 = vmatpush1.msra.mxu0 0.0
  %1416 = vmatprep.subr.mxu0 0.0
  %1417 = vmatpush1.msra.mxu0 0.0
  %1418 = vmatprep.subr.mxu0 0.0
  %1419 = vmatpush1.msra.mxu0 0.0
  %1420 = vmatprep.subr.mxu0 0.0
  %1421 = vmatpush1.msra.mxu0 0.0
  %1422 = vmatprep.subr.mxu0 0.0
  %1423 = vmatpush1.msra.mxu0 0.0
  %1424 = vmatprep.subr.mxu0 0.0
  %1425 = vmatpush1.msra.mxu0 0.0
  %1426 = vmatprep.subr.mxu0 0.0
  %1427 = vmatpush1.msra.mxu0 0.0
  %1428 = vmatprep.subr.mxu0 0.0
  %1429 = vmatpush1.msra.mxu0 0.0
  %1430 = vmatprep.subr.mxu0 0.0
  %1431 = vmatpush1.msra.mxu0 0.0
  %1432 = vmatprep.subr.mxu0 0.0
  %1433 = vmatpush1.msra.mxu0 0.0
  %1434 = vmatprep.subr.mxu0 0.0
  %1435 = vmatpush1.msra.mxu0 0.0
  %1436 = vmatprep.subr.mxu0 0.0
  %1437 = vmatpush1.msra.mxu0 0.0
  %1438 = vmatprep.subr.mxu0 0.0
  %1439 = vmatpush1.msra.mxu0 0.0
  %1440 = vmatprep.mubr.f32.mxu0 0.0
  %1441 = vmatmul.mubr.f32.gmra.mrb[0].mxu0 %v1360
  %v1442 = vpop.f32.mrb[0].mxu0
  %v1443 = vadd.f32 %v133, %v1442
  %v1444 = vpop.f32.mrb[0].mxu0
  %v1445 = vadd.f32 %v137, %v1444
  %1446 = vdwg.mxu0
  %1447 = vmatprep.subr.mxu0 0.0
  %1448 = vmatpush1.msra.mxu0 %v36
  %1449 = vmatprep.subr.mxu0 0.0
  %1450 = vmatpush1.msra.mxu0 %v39
  %1451 = vmatprep.subr.mxu0 0.0
  %1452 = vmatpush1.msra.mxu0 %v42
  %1453 = vmatprep.subr.mxu0 0.0
  %1454 = vmatpush1.msra.mxu0 %v45
  %1455 = vmatprep.subr.mxu0 0.0
  %1456 = vmatpush1.msra.mxu0 %v48
  %1457 = vmatprep.subr.mxu0 0.0
  %1458 = vmatpush1.msra.mxu0 %v51
  %1459 = vmatprep.subr.mxu0 0.0
  %1460 = vmatpush1.msra.mxu0 %v54
  %1461 = vmatprep.subr.mxu0 0.0
  %1462 = vmatpush1.msra.mxu0 %v57
  %1463 = vmatprep.subr.mxu0 0.0
  %1464 = vmatpush1.msra.mxu0 %v60
  %1465 = vmatprep.subr.mxu0 0.0
  %1466 = vmatpush1.msra.mxu0 %v63
  %1467 = vmatprep.subr.mxu0 0.0
  %1468 = vmatpush1.msra.mxu0 %v66
  %1469 = vmatprep.subr.mxu0 0.0
  %1470 = vmatpush1.msra.mxu0 %v69
  %1471 = vmatprep.subr.mxu0 0.0
  %1472 = vmatpush1.msra.mxu0 %v72
  %1473 = vmatprep.subr.mxu0 0.0
  %1474 = vmatpush1.msra.mxu0 %v75
  %1475 = vmatprep.subr.mxu0 0.0
  %1476 = vmatpush1.msra.mxu0 %v78
  %1477 = vmatprep.subr.mxu0 0.0
  %1478 = vmatpush1.msra.mxu0 %v81
  %1479 = vmatprep.subr.mxu0 0.0
  %1480 = vmatpush1.msra.mxu0 0.0
  %1481 = vmatprep.subr.mxu0 0.0
  %1482 = vmatpush1.msra.mxu0 0.0
  %1483 = vmatprep.subr.mxu0 0.0
  %1484 = vmatpush1.msra.mxu0 0.0
  %1485 = vmatprep.subr.mxu0 0.0
  %1486 = vmatpush1.msra.mxu0 0.0
  %1487 = vmatprep.subr.mxu0 0.0
  %1488 = vmatpush1.msra.mxu0 0.0
  %1489 = vmatprep.subr.mxu0 0.0
  %1490 = vmatpush1.msra.mxu0 0.0
  %1491 = vmatprep.subr.mxu0 0.0
  %1492 = vmatpush1.msra.mxu0 0.0
  %1493 = vmatprep.subr.mxu0 0.0
  %1494 = vmatpush1.msra.mxu0 0.0
  %1495 = vmatprep.subr.mxu0 0.0
  %1496 = vmatpush1.msra.mxu0 0.0
  %1497 = vmatprep.subr.mxu0 0.0
  %1498 = vmatpush1.msra.mxu0 0.0
  %1499 = vmatprep.subr.mxu0 0.0
  %1500 = vmatpush1.msra.mxu0 0.0
  %1501 = vmatprep.subr.mxu0 0.0
  %1502 = vmatpush1.msra.mxu0 0.0
  %1503 = vmatprep.subr.mxu0 0.0
  %1504 = vmatpush1.msra.mxu0 0.0
  %1505 = vmatprep.subr.mxu0 0.0
  %1506 = vmatpush1.msra.mxu0 0.0
  %1507 = vmatprep.subr.mxu0 0.0
  %1508 = vmatpush1.msra.mxu0 0.0
  %1509 = vmatprep.subr.mxu0 0.0
  %1510 = vmatpush1.msra.mxu0 0.0
  %1511 = vmatprep.mubr.f32.mxu0 0.0
  %1512 = vmatmul.mubr.f32.gmra.mrb[0].mxu0 %v1360
  %v1513 = vpop.f32.mrb[0].mxu0
  %v1514 = vadd.f32 %v141, %v1513
  %v1515 = vpop.f32.mrb[0].mxu0
  %1516 = vdwg.mxu0
  %v1517 = vadd.f32 %v1373, %v1443
  %v1518 = vxor.u32 %v1517, 2147483648
  %v1519 = vmul.f32 %v1518, 1.442695
  %v1520 = vpow.pop %v1519
  %v1521 = vadd.f32 %v1520, 1.0
  %v1522 = vrcp.pop %v1521
  %v1523 = vmul.f32 1.0, %v1522
  %v1524 = vadd.f32 %v1374, %v1445
  %v1525 = vxor.u32 %v1524, 2147483648
  %v1526 = vmul.f32 %v1525, 1.442695
  %v1527 = vpow.pop %v1526
  %v1528 = vadd.f32 %v1527, 1.0
  %v1529 = vrcp.pop %v1528
  %v1530 = vmul.f32 1.0, %v1529
  %v1531 = vmul.f32 %v1523, %v1514
  %v1532 = vadd.f32 %v1375, %v1531
  %v1533 = vtanh.pop %v1532
  %v1534 = vsub.f32 %v1360, %v1533
  %v1535 = vmul.f32 %v1530, %v1534
  %v1536 = vadd.f32 %v1533, %v1535
  %s1537 = scalar_lea.vmem [#allocation2], 14
  %1538 = vst [vmem:[%s1537] sm:$0x3] %v1536
  %1539 = vst [vmem:[%s9] sm:$0x3] %v1536
  %v1540 = vld [vmem:[#allocation2] sm:$0x3]
  %v1541 = vld [vmem:[#allocation2 + $0x2] sm:$0x3]
  %v1542 = vld [vmem:[#allocation2 + $0x4] sm:$0x3]
  %v1543 = vld [vmem:[#allocation2 + $0x6] sm:$0x3]
  %v1544 = vld [vmem:[#allocation2 + $0x8] sm:$0x3]
  %v1545 = vld [vmem:[#allocation2 + $0xa] sm:$0x3]
  %v1546 = vld [vmem:[#allocation2 + $0xc] sm:$0x3]
  %v1547 = vld [vmem:[#allocation2 + $0xe] sm:$0x3]
  %v1548 = vcombine.low %v1540, %v1542
  %v1550 = vunpack.c.l.s4 1983009808
  %v1551 = vunpack.c.0.s8 %v1550
  %v1552 = vlaneseq
  %v1553 = vshrl.u32 %v1552, 7
  %v1554 = vsub.s32 %v1551, %v1553
  %v1555 = vrot.slane %v1548, %v1554
  %v1556 = vcombine.low %v1541, %v1543
  %v1558 = vunpack.c.l.s4 1983009808
  %v1559 = vunpack.c.0.s8 %v1558
  %v1560 = vlaneseq
  %v1561 = vshrl.u32 %v1560, 7
  %v1562 = vsub.s32 %v1559, %v1561
  %v1563 = vrot.slane %v1556, %v1562
  %v1564 = vcombine.low %v1544, %v1546
  %v1566 = vunpack.c.l.s4 1983009808
  %v1567 = vunpack.c.0.s8 %v1566
  %v1568 = vlaneseq
  %v1569 = vshrl.u32 %v1568, 7
  %v1570 = vsub.s32 %v1567, %v1569
  %v1571 = vrot.slane %v1564, %v1570
  %v1572 = vcombine.low %v1545, %v1547
  %v1574 = vunpack.c.l.s4 1983009808
  %v1575 = vunpack.c.0.s8 %v1574
  %v1576 = vlaneseq
  %v1577 = vshrl.u32 %v1576, 7
  %v1578 = vsub.s32 %v1575, %v1577
  %v1579 = vrot.slane %v1572, %v1578
  %v1580 = vcombine.low %v1555, %v1563
  %v1582 = vunpack.c.l.s4 1934713408
  %v1583 = vunpack.c.0.s8 %v1582
  %v1584 = vlaneseq
  %v1585 = vshrl.u32 %v1584, 7
  %v1586 = vsub.s32 %v1583, %v1585
  %v1587 = vrot.slane %v1580, %v1586
  %v1588 = vcombine.low %v1571, %v1579
  %v1590 = vunpack.c.l.s4 1934713408
  %v1591 = vunpack.c.0.s8 %v1590
  %v1592 = vlaneseq
  %v1593 = vshrl.u32 %v1592, 7
  %v1594 = vsub.s32 %v1591, %v1593
  %v1595 = vrot.slane %v1588, %v1594
  %v1596 = vcombine.low %v1587, %v1595
  %v1597 = vcombine.high %v1587, %v1595
  %v1598 = vld [vmem:[%s6] sm:$0xff]
  %v1599 = vld [vmem:[%s6 + $0x8] sm:$0xff]
  %v1600 = vld [vmem:[%s6 + $0x10] sm:$0xff]
  %v1601 = vld [vmem:[%s6 + $0x18] sm:$0xff]
  %v1602 = vld [vmem:[%s6 + $0x20] sm:$0xff]
  %v1603 = vld [vmem:[%s6 + $0x28] sm:$0xff]
  %v1604 = vld [vmem:[%s6 + $0x30] sm:$0xff]
  %v1605 = vld [vmem:[%s6 + $0x38] sm:$0xff]
  %v1606 = vld [vmem:[%s6 + $0x40] sm:$0xff]
  %v1607 = vld [vmem:[%s6 + $0x48] sm:$0xff]
  %v1608 = vld [vmem:[%s6 + $0x50] sm:$0xff]
  %v1609 = vld [vmem:[%s6 + $0x58] sm:$0xff]
  %v1610 = vld [vmem:[%s6 + $0x60] sm:$0xff]
  %v1611 = vld [vmem:[%s6 + $0x68] sm:$0xff]
  %v1612 = vld [vmem:[%s6 + $0x70] sm:$0xff]
  %v1613 = vld [vmem:[%s6 + $0x78] sm:$0xff]
  %v1614 = vld [vmem:[#allocation3] sm:$0x1]
  %v1616 = vlaneseq
  %v1617 = vshrl.u32 %v1616, 7
  %v1618 = vsub.s32 0, %v1617
  %v1619 = vrot.slane %v1614, %v1618
  %1621 = vmatprep.subr.mxu0 0.0
  %1622 = vmatpush1.msra.mxu0 %v1598
  %1623 = vmatprep.subr.mxu0 0.0
  %1624 = vmatpush1.msra.mxu0 %v1599
  %1625 = vmatprep.subr.mxu0 0.0
  %1626 = vmatpush1.msra.mxu0 %v1600
  %1627 = vmatprep.subr.mxu0 0.0
  %1628 = vmatpush1.msra.mxu0 %v1601
  %1629 = vmatprep.subr.mxu0 0.0
  %1630 = vmatpush1.msra.mxu0 %v1602
  %1631 = vmatprep.subr.mxu0 0.0
  %1632 = vmatpush1.msra.mxu0 %v1603
  %1633 = vmatprep.subr.mxu0 0.0
  %1634 = vmatpush1.msra.mxu0 %v1604
  %1635 = vmatprep.subr.mxu0 0.0
  %1636 = vmatpush1.msra.mxu0 %v1605
  %1637 = vmatprep.subr.mxu0 0.0
  %1638 = vmatpush1.msra.mxu0 %v1606
  %1639 = vmatprep.subr.mxu0 0.0
  %1640 = vmatpush1.msra.mxu0 %v1607
  %1641 = vmatprep.subr.mxu0 0.0
  %1642 = vmatpush1.msra.mxu0 %v1608
  %1643 = vmatprep.subr.mxu0 0.0
  %1644 = vmatpush1.msra.mxu0 %v1609
  %1645 = vmatprep.subr.mxu0 0.0
  %1646 = vmatpush1.msra.mxu0 %v1610
  %1647 = vmatprep.subr.mxu0 0.0
  %1648 = vmatpush1.msra.mxu0 %v1611
  %1649 = vmatprep.subr.mxu0 0.0
  %1650 = vmatpush1.msra.mxu0 %v1612
  %1651 = vmatprep.subr.mxu0 0.0
  %1652 = vmatpush1.msra.mxu0 %v1613
  %1653 = vmatprep.subr.mxu0 0.0
  %1654 = vmatpush1.msra.mxu0 0.0
  %1655 = vmatprep.subr.mxu0 0.0
  %1656 = vmatpush1.msra.mxu0 0.0
  %1657 = vmatprep.subr.mxu0 0.0
  %1658 = vmatpush1.msra.mxu0 0.0
  %1659 = vmatprep.subr.mxu0 0.0
  %1660 = vmatpush1.msra.mxu0 0.0
  %1661 = vmatprep.subr.mxu0 0.0
  %1662 = vmatpush1.msra.mxu0 0.0
  %1663 = vmatprep.subr.mxu0 0.0
  %1664 = vmatpush1.msra.mxu0 0.0
  %1665 = vmatprep.subr.mxu0 0.0
  %1666 = vmatpush1.msra.mxu0 0.0
  %1667 = vmatprep.subr.mxu0 0.0
  %1668 = vmatpush1.msra.mxu0 0.0
  %1669 = vmatprep.subr.mxu0 0.0
  %1670 = vmatpush1.msra.mxu0 0.0
  %1671 = vmatprep.subr.mxu0 0.0
  %1672 = vmatpush1.msra.mxu0 0.0
  %1673 = vmatprep.subr.mxu0 0.0
  %1674 = vmatpush1.msra.mxu0 0.0
  %1675 = vmatprep.subr.mxu0 0.0
  %1676 = vmatpush1.msra.mxu0 0.0
  %1677 = vmatprep.subr.mxu0 0.0
  %1678 = vmatpush1.msra.mxu0 0.0
  %1679 = vmatprep.subr.mxu0 0.0
  %1680 = vmatpush1.msra.mxu0 0.0
  %1681 = vmatprep.subr.mxu0 0.0
  %1682 = vmatpush1.msra.mxu0 0.0
  %1683 = vmatprep.subr.mxu0 0.0
  %1684 = vmatpush1.msra.mxu0 0.0
  %1685 = vmatprep.mubr.f32.mxu0 0.0
  %1686 = vmatmul.mubr.f32.gmra.mrb[0].mxu0 %v1596
  %v1687 = vpop.f32.mrb[0].mxu0
  %v1688 = vadd.f32 %v1619, %v1687
  %v1689 = vpop.f32.mrb[0].mxu0
  %1690 = vmatprep.mubr.f32.mxu0 0.0
  %1691 = vmatmul.mubr.f32.gmra.mrb[0].mxu0 %v1597
  %v1692 = vpop.f32.mrb[0].mxu0
  %v1693 = vadd.f32 %v1619, %v1692
  %v1694 = vpop.f32.mrb[0].mxu0
  %1695 = vdwg.mxu0
  %vm1696 = vcmask 7168
  %1697 = vst.msk [vmem:[%s8] sm:$0xff] %vm1696, %v1688
  %1698 = vst.msk [vmem:[%s8 + $0x8] sm:$0xff] %vm1696, %v1693
  // Predicated region
  $region34: #{rnn_model_forward.1} parent=0 // pred_check
    _
  $region35: #{rnn_model_forward.1} parent=0 // pred_check_branch
    %1700 = sbr.rel (0) target = $region37
  $region36: #{rnn_model_forward.1} parent=0 // pred_region
    _
  $region37: #{rnn_model_forward.1} parent=0 // pred_fallthru
    _
  // Predicated region
  $region38: #{rnn_model_forward.1} parent=0 // pred_check
    _
  $region39: #{rnn_model_forward.1} parent=0 // pred_check_branch
    %1702 = sbr.rel (0) target = $region41
  $region40: #{rnn_model_forward.1} parent=0 // pred_region
    _
  $region41: #{rnn_model_forward.1} parent=0 // pred_fallthru
    _
  // Predicated region
  $region42: #{rnn_model_forward.1} parent=0 // pred_check
    _
  $region43: #{rnn_model_forward.1} parent=0 // pred_check_branch
    %1704 = sbr.rel (0) target = $region45
  $region44: #{rnn_model_forward.1} parent=0 // pred_region
    _
  $region45: #{rnn_model_forward.1} parent=0 // pred_fallthru
    _
  // Predicated region
  $region46: #{rnn_model_forward.1} parent=0 // pred_check
    _
  $region47: #{rnn_model_forward.1} parent=0 // pred_check_branch
    %1706 = sbr.rel (0) target = $region49
  $region48: #{rnn_model_forward.1} parent=0 // pred_region
    _
  $region49: #{rnn_model_forward.1} parent=0 // pred_fallthru
    _

</llo_original>
